<compile_context>
chip_gen: v6e
topology: v6e:2x2x1
jax: 0.10.0
libtpu: 0.0.40
codegen_flags: <defaults>
</compile_context>

<pallas_src>
import functools

import jax
import jax.numpy as jnp
from jax import lax
from jax.experimental import pallas as pl
from jax.experimental.pallas import tpu as pltpu

NEIGHBOR_K = 3  # from ImgtoClass_Metric(neighbor_k=3)


def _img2class_kernel(q_ref, s_ref, o_ref, *, n_cls, m_per_class, neighbor_k, n_pad):
    # q_ref: (1, C, HW)    raw query descriptors (channels-first, as stored in HBM)
    # s_ref: (C, N*M)      pre-normalized support descriptors, bf16, resident in VMEM
    # o_ref: (1, 1, n_pad) lane-dense score row for query i (only first n_cls lanes used)
    q = q_ref[0]                                   # (C, HW) f32
    qt = jnp.transpose(q)                          # (HW, C): in-kernel transpose of VMEM tile

    # L2-normalize each descriptor row (no eps — matches torch.norm followed by divide;
    # a zero-norm descriptor produces NaN exactly like the PyTorch module).
    qn = qt * lax.rsqrt(jnp.sum(qt * qt, axis=-1, keepdims=True))

    # One big cosine-similarity matmul on the MXU: (HW, C) @ (C, N*M) -> (HW, N*M).
    sim = jnp.dot(qn.astype(jnp.bfloat16), s_ref[...],
                  preferred_element_type=jnp.float32)

    hw = sim.shape[0]
    col = lax.broadcasted_iota(jnp.int32, (hw, m_per_class), 1)
    lane = lax.broadcasted_iota(jnp.int32, (1, 1, n_pad), 2)
    scores = jnp.zeros((1, 1, n_pad), jnp.float32)

    for j in range(n_cls):                         # unrolled; N is small (e.g. 5-way)
        t = lax.slice_in_dim(sim, j * m_per_class, (j + 1) * m_per_class, axis=1)
        row_acc = jnp.zeros((hw, 1), jnp.float32)  # per-row running sum of top-k values
        for _ in range(neighbor_k):
            mx = jnp.max(t, axis=-1, keepdims=True)        # (HW, 1)
            row_acc = row_acc + mx
            # Knock out a single (the first) occurrence of the max — torch.topk counts
            # duplicate values as distinct entries, so this is sum-equivalent.
            cand = jnp.where(t == mx, col, m_per_class)
            first = jnp.min(cand, axis=-1, keepdims=True)
            t = jnp.where(col == first, -jnp.inf, t)
        total = jnp.sum(row_acc)                   # scalar: class-j score for query i
        scores = scores + jnp.where(lane == j, total, 0.0)

    o_ref[...] = scores                            # single unmasked, lane-dense store


def img_to_class_metric(x1_nchw, support, neighbor_k=NEIGHBOR_K):
    """x1_nchw: (B, C, h, w) queries; support: (N, C, M) support descriptors per class
    (uniform M per class).  Returns (B, N) scores, matching ImgtoClass_Metric.forward."""
    B, C, h, w = x1_nchw.shape
    N, C2, M = support.shape
    assert C == C2
    assert M >= neighbor_k, "each class needs at least neighbor_k support descriptors"
    HW = h * w
    n_pad = max(128, ((N + 127) // 128) * 128)

    # Queries: free reshape of NCHW -> (B, C, HW); no HBM-side transpose pass.
    q = x1_nchw.reshape(B, C, HW).astype(jnp.float32)

    # Support: L2-normalize each descriptor (over C) ONCE, pack all classes along the
    # lane axis as a (C, N*M) bf16 slab that stays resident in VMEM for the whole grid.
    s = support.astype(jnp.float32)
    s = s * lax.rsqrt(jnp.sum(s * s, axis=1, keepdims=True))   # no eps (as in PyTorch)
    s = jnp.transpose(s, (1, 0, 2)).reshape(C, N * M).astype(jnp.bfloat16)

    kernel = functools.partial(
        _img2class_kernel, n_cls=N, m_per_class=M, neighbor_k=neighbor_k, n_pad=n_pad)

    out = pl.pallas_call(
        kernel,
        out_shape=jax.ShapeDtypeStruct((B, 1, n_pad), jnp.float32),
        grid_spec=pltpu.PrefetchScalarGridSpec(
            num_scalar_prefetch=0,
            grid=(B,),
            in_specs=[
                pl.BlockSpec((1, C, HW), lambda i: (i, 0, 0)),
                pl.BlockSpec((C, N * M), lambda i: (0, 0)),   # constant index -> resident
            ],
            out_specs=pl.BlockSpec((1, 1, n_pad), lambda i: (i, 0, 0)),
        ),
        compiler_params=pltpu.CompilerParams(
            dimension_semantics=("parallel",)),
    )(q, s)
    # TODO(synk): for real DN4 sizes (HW~441, N*M~10k) tile the N*M axis into VMEM-sized
    # chunks (especially on v7x's 64 MiB VMEM) with a running per-class top-k.
    return out[:, 0, :N]


def _reference(x1_nchw, support, k=NEIGHBOR_K):
    B, C, h, w = x1_nchw.shape
    q = jnp.transpose(x1_nchw.reshape(B, C, h * w), (0, 2, 1))
    qn = q / jnp.linalg.norm(q, axis=-1, keepdims=True)
    sn = support / jnp.linalg.norm(support, axis=1, keepdims=True)
    sim = jnp.einsum("bqc,ncm->bnqm", qn, sn)
    topv = lax.top_k(sim, k)[0]
    return jnp.sum(topv, axis=(-1, -2))  # (B, N)


if __name__ == "__main__":
    # Small shapes consistent with the module: B queries, C channels, h*w local
    # descriptors per query, N classes each with M support descriptors (5-way, 1-shot).
    B, C, h, w = 2, 32, 8, 8
    N, M = 5, 64

    key = jax.random.PRNGKey(0)
    k1, k2 = jax.random.split(key)
    x1 = jax.random.normal(k1, (B, C, h, w), dtype=jnp.float32)
    support = jax.random.normal(k2, (N, C, M), dtype=jnp.float32)

    out = img_to_class_metric(x1, support)
    out = jax.block_until_ready(out)

    ref = _reference(x1, support)
    assert out.shape == (B, N)
    # bf16 MXU operands vs f32 reference -> loose-but-safe tolerance.
    assert jnp.allclose(out, ref, atol=1e-1, rtol=1e-2), (out, ref)

    print("KERNEL_OK")
</pallas_src>

<mosaic_0001>
module attributes {stable_mosaic.version = 11 : i64} {
  func.func @_img2class_kernel(%arg0: i32, %arg1: memref<1x32x64xf32, #tpu.memory_space<vmem>>, %arg2: memref<32x320xbf16, #tpu.memory_space<vmem>>, %arg3: memref<1x1x128xf32, #tpu.memory_space<vmem>>) attributes {dimension_semantics = [#tpu.dimension_semantics<parallel>], iteration_bounds = array<i64: 2>, scalar_prefetch = 0 : i64, scratch_operands = 0 : i64, tpu.core_type = #tpu.core_type<tc>, window_params = [{transform_indices = @transform_0, window_bounds = array<i64: 1, 32, 64>}, {pipeline_mode = #tpu.pipeline_mode<synchronous>, transform_indices = @transform_1, window_bounds = array<i64: 32, 320>}, {transform_indices = @transform_2, window_bounds = array<i64: 1, 1, 128>}]} {
    %c0 = arith.constant 0 : index
    %c0_0 = arith.constant 0 : index
    %c0_1 = arith.constant 0 : index
    %0 = vector.load %arg1[%c0, %c0_0, %c0_1] : memref<1x32x64xf32, #tpu.memory_space<vmem>>, vector<1x32x64xf32>
    %1 = vector.shape_cast %0 : vector<1x32x64xf32> to vector<32x64xf32>
    %2 = tpu.transpose %1, [1, 0] : vector<32x64xf32> -> vector<64x32xf32>
    %3 = arith.mulf %2, %2 : vector<64x32xf32>
    %cst = arith.constant dense<0.000000e+00> : vector<64xf32>
    %4 = vector.multi_reduction <add>, %3, %cst [1] : vector<64x32xf32> to vector<64xf32>
    %5 = vector.shape_cast %4 : vector<64xf32> to vector<64x1xf32>
    %6 = math.rsqrt %5 : vector<64x1xf32>
    %7 = vector.broadcast %6 : vector<64x1xf32> to vector<64x32xf32>
    %8 = arith.mulf %2, %7 : vector<64x32xf32>
    %9 = arith.truncf %8 : vector<64x32xf32> to vector<64x32xbf16>
    %c0_2 = arith.constant 0 : index
    %c0_3 = arith.constant 0 : index
    %10 = vector.load %arg2[%c0_2, %c0_3] : memref<32x320xbf16, #tpu.memory_space<vmem>>, vector<32x320xbf16>
    %cst_4 = arith.constant dense<0.000000e+00> : vector<64x320xf32>
    %11 = tpu.matmul %9, %10, %cst_4 {dimension_numbers = #tpu.dot_dimension_numbers<[1], [0], [0], [1], [0, 0, 1, 1], [], []>} : vector<64x32xbf16>, vector<32x320xbf16>, vector<64x320xf32> -> vector<64x320xf32>
    %12 = tpu.iota {dimensions = array<i32: 1>} : vector<64x64xi32>
    %13 = tpu.iota {dimensions = array<i32: 2>} : vector<1x1x128xi32>
    %cst_5 = arith.constant 0.000000e+00 : f32
    %14 = vector.broadcast %cst_5 : f32 to vector<1x1x128xf32>
    %15 = vector.extract_strided_slice %11 {offsets = [0, 0], sizes = [64, 64], strides = [1, 1]} : vector<64x320xf32> to vector<64x64xf32>
    %cst_6 = arith.constant 0.000000e+00 : f32
    %16 = vector.broadcast %cst_6 : f32 to vector<64x1xf32>
    %cst_7 = arith.constant dense<0xFF800000> : vector<64xf32>
    %17 = vector.multi_reduction <maximumf>, %15, %cst_7 [1] : vector<64x64xf32> to vector<64xf32>
    %18 = vector.shape_cast %17 : vector<64xf32> to vector<64x1xf32>
    %19 = arith.addf %16, %18 : vector<64x1xf32>
    %20 = vector.broadcast %18 : vector<64x1xf32> to vector<64x64xf32>
    %21 = arith.cmpf oeq, %15, %20 : vector<64x64xf32>
    %c64_i32 = arith.constant 64 : i32
    %22 = vector.broadcast %c64_i32 : i32 to vector<64x64xi32>
    %23 = arith.select %21, %12, %22 : vector<64x64xi1>, vector<64x64xi32>
    %cst_8 = arith.constant dense<2147483647> : vector<64xi32>
    %24 = vector.multi_reduction <minsi>, %23, %cst_8 [1] : vector<64x64xi32> to vector<64xi32>
    %25 = vector.shape_cast %24 : vector<64xi32> to vector<64x1xi32>
    %26 = vector.broadcast %25 : vector<64x1xi32> to vector<64x64xi32>
    %27 = arith.cmpi eq, %12, %26 : vector<64x64xi32>
    %cst_9 = arith.constant 0xFF800000 : f32
    %28 = vector.broadcast %cst_9 : f32 to vector<64x64xf32>
    %29 = arith.select %27, %28, %15 : vector<64x64xi1>, vector<64x64xf32>
    %cst_10 = arith.constant dense<0xFF800000> : vector<64xf32>
    %30 = vector.multi_reduction <maximumf>, %29, %cst_10 [1] : vector<64x64xf32> to vector<64xf32>
    %31 = vector.shape_cast %30 : vector<64xf32> to vector<64x1xf32>
    %32 = arith.addf %19, %31 : vector<64x1xf32>
    %33 = vector.broadcast %31 : vector<64x1xf32> to vector<64x64xf32>
    %34 = arith.cmpf oeq, %29, %33 : vector<64x64xf32>
    %c64_i32_11 = arith.constant 64 : i32
    %35 = vector.broadcast %c64_i32_11 : i32 to vector<64x64xi32>
    %36 = arith.select %34, %12, %35 : vector<64x64xi1>, vector<64x64xi32>
    %cst_12 = arith.constant dense<2147483647> : vector<64xi32>
    %37 = vector.multi_reduction <minsi>, %36, %cst_12 [1] : vector<64x64xi32> to vector<64xi32>
    %38 = vector.shape_cast %37 : vector<64xi32> to vector<64x1xi32>
    %39 = vector.broadcast %38 : vector<64x1xi32> to vector<64x64xi32>
    %40 = arith.cmpi eq, %12, %39 : vector<64x64xi32>
    %cst_13 = arith.constant 0xFF800000 : f32
    %41 = vector.broadcast %cst_13 : f32 to vector<64x64xf32>
    %42 = arith.select %40, %41, %29 : vector<64x64xi1>, vector<64x64xf32>
    %cst_14 = arith.constant dense<0xFF800000> : vector<64xf32>
    %43 = vector.multi_reduction <maximumf>, %42, %cst_14 [1] : vector<64x64xf32> to vector<64xf32>
    %44 = vector.shape_cast %43 : vector<64xf32> to vector<64x1xf32>
    %45 = arith.addf %32, %44 : vector<64x1xf32>
    %46 = vector.shape_cast %45 : vector<64x1xf32> to vector<1x64x1xf32>
    %cst_15 = arith.constant dense<0.000000e+00> : vector<1xf32>
    %47 = vector.multi_reduction <add>, %46, %cst_15 [1, 2] : vector<1x64x1xf32> to vector<1xf32>
    %48 = vector.shape_cast %47 : vector<1xf32> to vector<1x1x1xf32>
    %49 = vector.extract %48[0, 0, 0] : f32 from vector<1x1x1xf32>
    %c0_i32 = arith.constant 0 : i32
    %50 = vector.broadcast %c0_i32 : i32 to vector<1x1x128xi32>
    %51 = arith.cmpi eq, %13, %50 : vector<1x1x128xi32>
    %cst_16 = arith.constant 0.000000e+00 : f32
    %52 = vector.broadcast %49 : f32 to vector<1x1x128xf32>
    %53 = vector.broadcast %cst_16 : f32 to vector<1x1x128xf32>
    %54 = arith.select %51, %52, %53 : vector<1x1x128xi1>, vector<1x1x128xf32>
    %55 = arith.addf %14, %54 : vector<1x1x128xf32>
    %56 = vector.extract_strided_slice %11 {offsets = [0, 64], sizes = [64, 64], strides = [1, 1]} : vector<64x320xf32> to vector<64x64xf32>
    %cst_17 = arith.constant 0.000000e+00 : f32
    %57 = vector.broadcast %cst_17 : f32 to vector<64x1xf32>
    %cst_18 = arith.constant dense<0xFF800000> : vector<64xf32>
    %58 = vector.multi_reduction <maximumf>, %56, %cst_18 [1] : vector<64x64xf32> to vector<64xf32>
    %59 = vector.shape_cast %58 : vector<64xf32> to vector<64x1xf32>
    %60 = arith.addf %57, %59 : vector<64x1xf32>
    %61 = vector.broadcast %59 : vector<64x1xf32> to vector<64x64xf32>
    %62 = arith.cmpf oeq, %56, %61 : vector<64x64xf32>
    %c64_i32_19 = arith.constant 64 : i32
    %63 = vector.broadcast %c64_i32_19 : i32 to vector<64x64xi32>
    %64 = arith.select %62, %12, %63 : vector<64x64xi1>, vector<64x64xi32>
    %cst_20 = arith.constant dense<2147483647> : vector<64xi32>
    %65 = vector.multi_reduction <minsi>, %64, %cst_20 [1] : vector<64x64xi32> to vector<64xi32>
    %66 = vector.shape_cast %65 : vector<64xi32> to vector<64x1xi32>
    %67 = vector.broadcast %66 : vector<64x1xi32> to vector<64x64xi32>
    %68 = arith.cmpi eq, %12, %67 : vector<64x64xi32>
    %cst_21 = arith.constant 0xFF800000 : f32
    %69 = vector.broadcast %cst_21 : f32 to vector<64x64xf32>
    %70 = arith.select %68, %69, %56 : vector<64x64xi1>, vector<64x64xf32>
    %cst_22 = arith.constant dense<0xFF800000> : vector<64xf32>
    %71 = vector.multi_reduction <maximumf>, %70, %cst_22 [1] : vector<64x64xf32> to vector<64xf32>
    %72 = vector.shape_cast %71 : vector<64xf32> to vector<64x1xf32>
    %73 = arith.addf %60, %72 : vector<64x1xf32>
    %74 = vector.broadcast %72 : vector<64x1xf32> to vector<64x64xf32>
    %75 = arith.cmpf oeq, %70, %74 : vector<64x64xf32>
    %c64_i32_23 = arith.constant 64 : i32
    %76 = vector.broadcast %c64_i32_23 : i32 to vector<64x64xi32>
    %77 = arith.select %75, %12, %76 : vector<64x64xi1>, vector<64x64xi32>
    %cst_24 = arith.constant dense<2147483647> : vector<64xi32>
    %78 = vector.multi_reduction <minsi>, %77, %cst_24 [1] : vector<64x64xi32> to vector<64xi32>
    %79 = vector.shape_cast %78 : vector<64xi32> to vector<64x1xi32>
    %80 = vector.broadcast %79 : vector<64x1xi32> to vector<64x64xi32>
    %81 = arith.cmpi eq, %12, %80 : vector<64x64xi32>
    %cst_25 = arith.constant 0xFF800000 : f32
    %82 = vector.broadcast %cst_25 : f32 to vector<64x64xf32>
    %83 = arith.select %81, %82, %70 : vector<64x64xi1>, vector<64x64xf32>
    %cst_26 = arith.constant dense<0xFF800000> : vector<64xf32>
    %84 = vector.multi_reduction <maximumf>, %83, %cst_26 [1] : vector<64x64xf32> to vector<64xf32>
    %85 = vector.shape_cast %84 : vector<64xf32> to vector<64x1xf32>
    %86 = arith.addf %73, %85 : vector<64x1xf32>
    %87 = vector.shape_cast %86 : vector<64x1xf32> to vector<1x64x1xf32>
    %cst_27 = arith.constant dense<0.000000e+00> : vector<1xf32>
    %88 = vector.multi_reduction <add>, %87, %cst_27 [1, 2] : vector<1x64x1xf32> to vector<1xf32>
    %89 = vector.shape_cast %88 : vector<1xf32> to vector<1x1x1xf32>
    %90 = vector.extract %89[0, 0, 0] : f32 from vector<1x1x1xf32>
    %c1_i32 = arith.constant 1 : i32
    %91 = vector.broadcast %c1_i32 : i32 to vector<1x1x128xi32>
    %92 = arith.cmpi eq, %13, %91 : vector<1x1x128xi32>
    %cst_28 = arith.constant 0.000000e+00 : f32
    %93 = vector.broadcast %90 : f32 to vector<1x1x128xf32>
    %94 = vector.broadcast %cst_28 : f32 to vector<1x1x128xf32>
    %95 = arith.select %92, %93, %94 : vector<1x1x128xi1>, vector<1x1x128xf32>
    %96 = arith.addf %55, %95 : vector<1x1x128xf32>
    %97 = vector.extract_strided_slice %11 {offsets = [0, 128], sizes = [64, 64], strides = [1, 1]} : vector<64x320xf32> to vector<64x64xf32>
    %cst_29 = arith.constant 0.000000e+00 : f32
    %98 = vector.broadcast %cst_29 : f32 to vector<64x1xf32>
    %cst_30 = arith.constant dense<0xFF800000> : vector<64xf32>
    %99 = vector.multi_reduction <maximumf>, %97, %cst_30 [1] : vector<64x64xf32> to vector<64xf32>
    %100 = vector.shape_cast %99 : vector<64xf32> to vector<64x1xf32>
    %101 = arith.addf %98, %100 : vector<64x1xf32>
    %102 = vector.broadcast %100 : vector<64x1xf32> to vector<64x64xf32>
    %103 = arith.cmpf oeq, %97, %102 : vector<64x64xf32>
    %c64_i32_31 = arith.constant 64 : i32
    %104 = vector.broadcast %c64_i32_31 : i32 to vector<64x64xi32>
    %105 = arith.select %103, %12, %104 : vector<64x64xi1>, vector<64x64xi32>
    %cst_32 = arith.constant dense<2147483647> : vector<64xi32>
    %106 = vector.multi_reduction <minsi>, %105, %cst_32 [1] : vector<64x64xi32> to vector<64xi32>
    %107 = vector.shape_cast %106 : vector<64xi32> to vector<64x1xi32>
    %108 = vector.broadcast %107 : vector<64x1xi32> to vector<64x64xi32>
    %109 = arith.cmpi eq, %12, %108 : vector<64x64xi32>
    %cst_33 = arith.constant 0xFF800000 : f32
    %110 = vector.broadcast %cst_33 : f32 to vector<64x64xf32>
    %111 = arith.select %109, %110, %97 : vector<64x64xi1>, vector<64x64xf32>
    %cst_34 = arith.constant dense<0xFF800000> : vector<64xf32>
    %112 = vector.multi_reduction <maximumf>, %111, %cst_34 [1] : vector<64x64xf32> to vector<64xf32>
    %113 = vector.shape_cast %112 : vector<64xf32> to vector<64x1xf32>
    %114 = arith.addf %101, %113 : vector<64x1xf32>
    %115 = vector.broadcast %113 : vector<64x1xf32> to vector<64x64xf32>
    %116 = arith.cmpf oeq, %111, %115 : vector<64x64xf32>
    %c64_i32_35 = arith.constant 64 : i32
    %117 = vector.broadcast %c64_i32_35 : i32 to vector<64x64xi32>
    %118 = arith.select %116, %12, %117 : vector<64x64xi1>, vector<64x64xi32>
    %cst_36 = arith.constant dense<2147483647> : vector<64xi32>
    %119 = vector.multi_reduction <minsi>, %118, %cst_36 [1] : vector<64x64xi32> to vector<64xi32>
    %120 = vector.shape_cast %119 : vector<64xi32> to vector<64x1xi32>
    %121 = vector.broadcast %120 : vector<64x1xi32> to vector<64x64xi32>
    %122 = arith.cmpi eq, %12, %121 : vector<64x64xi32>
    %cst_37 = arith.constant 0xFF800000 : f32
    %123 = vector.broadcast %cst_37 : f32 to vector<64x64xf32>
    %124 = arith.select %122, %123, %111 : vector<64x64xi1>, vector<64x64xf32>
    %cst_38 = arith.constant dense<0xFF800000> : vector<64xf32>
    %125 = vector.multi_reduction <maximumf>, %124, %cst_38 [1] : vector<64x64xf32> to vector<64xf32>
    %126 = vector.shape_cast %125 : vector<64xf32> to vector<64x1xf32>
    %127 = arith.addf %114, %126 : vector<64x1xf32>
    %128 = vector.shape_cast %127 : vector<64x1xf32> to vector<1x64x1xf32>
    %cst_39 = arith.constant dense<0.000000e+00> : vector<1xf32>
    %129 = vector.multi_reduction <add>, %128, %cst_39 [1, 2] : vector<1x64x1xf32> to vector<1xf32>
    %130 = vector.shape_cast %129 : vector<1xf32> to vector<1x1x1xf32>
    %131 = vector.extract %130[0, 0, 0] : f32 from vector<1x1x1xf32>
    %c2_i32 = arith.constant 2 : i32
    %132 = vector.broadcast %c2_i32 : i32 to vector<1x1x128xi32>
    %133 = arith.cmpi eq, %13, %132 : vector<1x1x128xi32>
    %cst_40 = arith.constant 0.000000e+00 : f32
    %134 = vector.broadcast %131 : f32 to vector<1x1x128xf32>
    %135 = vector.broadcast %cst_40 : f32 to vector<1x1x128xf32>
    %136 = arith.select %133, %134, %135 : vector<1x1x128xi1>, vector<1x1x128xf32>
    %137 = arith.addf %96, %136 : vector<1x1x128xf32>
    %138 = vector.extract_strided_slice %11 {offsets = [0, 192], sizes = [64, 64], strides = [1, 1]} : vector<64x320xf32> to vector<64x64xf32>
    %cst_41 = arith.constant 0.000000e+00 : f32
    %139 = vector.broadcast %cst_41 : f32 to vector<64x1xf32>
    %cst_42 = arith.constant dense<0xFF800000> : vector<64xf32>
    %140 = vector.multi_reduction <maximumf>, %138, %cst_42 [1] : vector<64x64xf32> to vector<64xf32>
    %141 = vector.shape_cast %140 : vector<64xf32> to vector<64x1xf32>
    %142 = arith.addf %139, %141 : vector<64x1xf32>
    %143 = vector.broadcast %141 : vector<64x1xf32> to vector<64x64xf32>
    %144 = arith.cmpf oeq, %138, %143 : vector<64x64xf32>
    %c64_i32_43 = arith.constant 64 : i32
    %145 = vector.broadcast %c64_i32_43 : i32 to vector<64x64xi32>
    %146 = arith.select %144, %12, %145 : vector<64x64xi1>, vector<64x64xi32>
    %cst_44 = arith.constant dense<2147483647> : vector<64xi32>
    %147 = vector.multi_reduction <minsi>, %146, %cst_44 [1] : vector<64x64xi32> to vector<64xi32>
    %148 = vector.shape_cast %147 : vector<64xi32> to vector<64x1xi32>
    %149 = vector.broadcast %148 : vector<64x1xi32> to vector<64x64xi32>
    %150 = arith.cmpi eq, %12, %149 : vector<64x64xi32>
    %cst_45 = arith.constant 0xFF800000 : f32
    %151 = vector.broadcast %cst_45 : f32 to vector<64x64xf32>
    %152 = arith.select %150, %151, %138 : vector<64x64xi1>, vector<64x64xf32>
    %cst_46 = arith.constant dense<0xFF800000> : vector<64xf32>
    %153 = vector.multi_reduction <maximumf>, %152, %cst_46 [1] : vector<64x64xf32> to vector<64xf32>
    %154 = vector.shape_cast %153 : vector<64xf32> to vector<64x1xf32>
    %155 = arith.addf %142, %154 : vector<64x1xf32>
    %156 = vector.broadcast %154 : vector<64x1xf32> to vector<64x64xf32>
    %157 = arith.cmpf oeq, %152, %156 : vector<64x64xf32>
    %c64_i32_47 = arith.constant 64 : i32
    %158 = vector.broadcast %c64_i32_47 : i32 to vector<64x64xi32>
    %159 = arith.select %157, %12, %158 : vector<64x64xi1>, vector<64x64xi32>
    %cst_48 = arith.constant dense<2147483647> : vector<64xi32>
    %160 = vector.multi_reduction <minsi>, %159, %cst_48 [1] : vector<64x64xi32> to vector<64xi32>
    %161 = vector.shape_cast %160 : vector<64xi32> to vector<64x1xi32>
    %162 = vector.broadcast %161 : vector<64x1xi32> to vector<64x64xi32>
    %163 = arith.cmpi eq, %12, %162 : vector<64x64xi32>
    %cst_49 = arith.constant 0xFF800000 : f32
    %164 = vector.broadcast %cst_49 : f32 to vector<64x64xf32>
    %165 = arith.select %163, %164, %152 : vector<64x64xi1>, vector<64x64xf32>
    %cst_50 = arith.constant dense<0xFF800000> : vector<64xf32>
    %166 = vector.multi_reduction <maximumf>, %165, %cst_50 [1] : vector<64x64xf32> to vector<64xf32>
    %167 = vector.shape_cast %166 : vector<64xf32> to vector<64x1xf32>
    %168 = arith.addf %155, %167 : vector<64x1xf32>
    %169 = vector.shape_cast %168 : vector<64x1xf32> to vector<1x64x1xf32>
    %cst_51 = arith.constant dense<0.000000e+00> : vector<1xf32>
    %170 = vector.multi_reduction <add>, %169, %cst_51 [1, 2] : vector<1x64x1xf32> to vector<1xf32>
    %171 = vector.shape_cast %170 : vector<1xf32> to vector<1x1x1xf32>
    %172 = vector.extract %171[0, 0, 0] : f32 from vector<1x1x1xf32>
    %c3_i32 = arith.constant 3 : i32
    %173 = vector.broadcast %c3_i32 : i32 to vector<1x1x128xi32>
    %174 = arith.cmpi eq, %13, %173 : vector<1x1x128xi32>
    %cst_52 = arith.constant 0.000000e+00 : f32
    %175 = vector.broadcast %172 : f32 to vector<1x1x128xf32>
    %176 = vector.broadcast %cst_52 : f32 to vector<1x1x128xf32>
    %177 = arith.select %174, %175, %176 : vector<1x1x128xi1>, vector<1x1x128xf32>
    %178 = arith.addf %137, %177 : vector<1x1x128xf32>
    %179 = vector.extract_strided_slice %11 {offsets = [0, 256], sizes = [64, 64], strides = [1, 1]} : vector<64x320xf32> to vector<64x64xf32>
    %cst_53 = arith.constant 0.000000e+00 : f32
    %180 = vector.broadcast %cst_53 : f32 to vector<64x1xf32>
    %cst_54 = arith.constant dense<0xFF800000> : vector<64xf32>
    %181 = vector.multi_reduction <maximumf>, %179, %cst_54 [1] : vector<64x64xf32> to vector<64xf32>
    %182 = vector.shape_cast %181 : vector<64xf32> to vector<64x1xf32>
    %183 = arith.addf %180, %182 : vector<64x1xf32>
    %184 = vector.broadcast %182 : vector<64x1xf32> to vector<64x64xf32>
    %185 = arith.cmpf oeq, %179, %184 : vector<64x64xf32>
    %c64_i32_55 = arith.constant 64 : i32
    %186 = vector.broadcast %c64_i32_55 : i32 to vector<64x64xi32>
    %187 = arith.select %185, %12, %186 : vector<64x64xi1>, vector<64x64xi32>
    %cst_56 = arith.constant dense<2147483647> : vector<64xi32>
    %188 = vector.multi_reduction <minsi>, %187, %cst_56 [1] : vector<64x64xi32> to vector<64xi32>
    %189 = vector.shape_cast %188 : vector<64xi32> to vector<64x1xi32>
    %190 = vector.broadcast %189 : vector<64x1xi32> to vector<64x64xi32>
    %191 = arith.cmpi eq, %12, %190 : vector<64x64xi32>
    %cst_57 = arith.constant 0xFF800000 : f32
    %192 = vector.broadcast %cst_57 : f32 to vector<64x64xf32>
    %193 = arith.select %191, %192, %179 : vector<64x64xi1>, vector<64x64xf32>
    %cst_58 = arith.constant dense<0xFF800000> : vector<64xf32>
    %194 = vector.multi_reduction <maximumf>, %193, %cst_58 [1] : vector<64x64xf32> to vector<64xf32>
    %195 = vector.shape_cast %194 : vector<64xf32> to vector<64x1xf32>
    %196 = arith.addf %183, %195 : vector<64x1xf32>
    %197 = vector.broadcast %195 : vector<64x1xf32> to vector<64x64xf32>
    %198 = arith.cmpf oeq, %193, %197 : vector<64x64xf32>
    %c64_i32_59 = arith.constant 64 : i32
    %199 = vector.broadcast %c64_i32_59 : i32 to vector<64x64xi32>
    %200 = arith.select %198, %12, %199 : vector<64x64xi1>, vector<64x64xi32>
    %cst_60 = arith.constant dense<2147483647> : vector<64xi32>
    %201 = vector.multi_reduction <minsi>, %200, %cst_60 [1] : vector<64x64xi32> to vector<64xi32>
    %202 = vector.shape_cast %201 : vector<64xi32> to vector<64x1xi32>
    %203 = vector.broadcast %202 : vector<64x1xi32> to vector<64x64xi32>
    %204 = arith.cmpi eq, %12, %203 : vector<64x64xi32>
    %cst_61 = arith.constant 0xFF800000 : f32
    %205 = vector.broadcast %cst_61 : f32 to vector<64x64xf32>
    %206 = arith.select %204, %205, %193 : vector<64x64xi1>, vector<64x64xf32>
    %cst_62 = arith.constant dense<0xFF800000> : vector<64xf32>
    %207 = vector.multi_reduction <maximumf>, %206, %cst_62 [1] : vector<64x64xf32> to vector<64xf32>
    %208 = vector.shape_cast %207 : vector<64xf32> to vector<64x1xf32>
    %209 = arith.addf %196, %208 : vector<64x1xf32>
    %210 = vector.shape_cast %209 : vector<64x1xf32> to vector<1x64x1xf32>
    %cst_63 = arith.constant dense<0.000000e+00> : vector<1xf32>
    %211 = vector.multi_reduction <add>, %210, %cst_63 [1, 2] : vector<1x64x1xf32> to vector<1xf32>
    %212 = vector.shape_cast %211 : vector<1xf32> to vector<1x1x1xf32>
    %213 = vector.extract %212[0, 0, 0] : f32 from vector<1x1x1xf32>
    %c4_i32 = arith.constant 4 : i32
    %214 = vector.broadcast %c4_i32 : i32 to vector<1x1x128xi32>
    %215 = arith.cmpi eq, %13, %214 : vector<1x1x128xi32>
    %cst_64 = arith.constant 0.000000e+00 : f32
    %216 = vector.broadcast %213 : f32 to vector<1x1x128xf32>
    %217 = vector.broadcast %cst_64 : f32 to vector<1x1x128xf32>
    %218 = arith.select %215, %216, %217 : vector<1x1x128xi1>, vector<1x1x128xf32>
    %219 = arith.addf %178, %218 : vector<1x1x128xf32>
    %c0_65 = arith.constant 0 : index
    %c0_66 = arith.constant 0 : index
    %c0_67 = arith.constant 0 : index
    %220 = vector.load %arg3[%c0_65, %c0_66, %c0_67] : memref<1x1x128xf32, #tpu.memory_space<vmem>>, vector<1x1x128xf32>
    tpu.vector_store %arg3[%c0_65, %c0_66, %c0_67], %219 {strides = array<i32>} : memref<1x1x128xf32, #tpu.memory_space<vmem>>, vector<1x1x128xf32>,
    return
  }
  func.func @transform_0(%arg0: i32) -> (i32, i32, i32) {
    %c0_i32 = arith.constant 0 : i32
    %c0_i32_0 = arith.constant 0 : i32
    %c0_i32_1 = arith.constant 0 : i32
    return %arg0, %c0_i32, %c0_i32_0 : i32, i32, i32
  }
  func.func @transform_1(%arg0: i32) -> (i32, i32) {
    %c0_i32 = arith.constant 0 : i32
    %c0_i32_0 = arith.constant 0 : i32
    %c0_i32_1 = arith.constant 0 : i32
    return %c0_i32, %c0_i32_0 : i32, i32
  }
  func.func @transform_2(%arg0: i32) -> (i32, i32, i32) {
    %c0_i32 = arith.constant 0 : i32
    %c0_i32_0 = arith.constant 0 : i32
    %c0_i32_1 = arith.constant 0 : i32
    return %arg0, %c0_i32, %c0_i32_0 : i32, i32, i32
  }
}

</mosaic_0001>

<llo_original>
// kernel: tpu_custom_call.1
$region0: #{tpu_custom_call.1}
  #allocation0 [shape = 'u32[]', space=smem, size = 0x4, offset = 0x4, fixed_abs, tag = 'smem constant byte address 0x4 - core index']
  #allocation1 [shape = 'u32[144,128]{1,0:T(1,128)}', space=vmem, size = 0x12000, scoped, tag = 'internal scratch']
  %s0 = inlined_call_operand.hbm [shape: f32[2,32,64], index: 0, kind: input, shape index: {}]
  %s1 = inlined_call_operand.hbm [shape: bf16[32,320], index: 1, kind: input, shape index: {}]
  %s2 = inlined_call_operand.hbm [shape: f32[2,1,128], index: 2, kind: output, shape index: {}]
  %s3 = sld [smem:[#allocation0]]
  $region49: #{tpu_custom_call.1} parent=0
    _
  %s5 = ssub.s32 1, %s3
  %s6 = scalar_select 0, %s5, %s3
  $region1: #{tpu_custom_call.1} parent=0
    #allocation2 [shape = 'u8[32768]{0}', space=vmem, size = 0x8000, scoped, tag = 'input window, operand 0']
    #allocation3 [shape = 's32[2]{0}', space=sflag, size = 0x8, scoped, tag = 'scoped memory for tpu_custom_call.1']
    #allocation4 [shape = 's32[2]{0}', space=sflag, size = 0x8, scoped, tag = 'scoped memory for tpu_custom_call.1']
    #allocation5 [shape = 'u8[24576]{0}', space=vmem, size = 0x6000, scoped, tag = 'input window, operand 1, single buffered']
    #allocation6 [shape = 's32[1]{0}', space=sflag, size = 0x4, scoped, tag = 'scoped memory for tpu_custom_call.1']
    #allocation7 [shape = 'u8[1024]{0}', space=vmem, size = 0x400, scoped, tag = 'output window, operand 0']
    %7 = vsyncpa [#allocation3], 0
    %s8 = scalar_lea.sflag [#allocation3], 1
    %9 = vsyncpa %s8, 0
    %10 = vsyncpa [#allocation6], 0
    %11 = vsyncpa [#allocation4], 0
    %s12 = scalar_lea.sflag [#allocation4], 1
    %13 = vsyncpa %s12, 0
    loop: start=0, step=1, limit=4
    $region2: #{tpu_custom_call.1} parent=1 // loop_pre_header
      _
    $region3: #{tpu_custom_call.1} parent=1 // loop_header
      %s15 = sphi 0, %s19
      %p16 = scmp.ge.s32.totalorder %s15, 4
      %s25 = sphi 0, %s27
      %s28 = sphi 0, %s25
      %s29 = sphi 0, %s28
      %s45 = sphi 0, %s29
      %s49 = sphi 0, %s49
      %s51 = sphi 0, %s49
      %s52 = sphi 0, %s51
      %s66 = sphi 0, %s52
      %s72 = sphi 0, %s74
      %s75 = sphi 0, %s72
      %s76 = sphi 0, %s75
      %s92 = sphi 0, %s76
    $region4: #{tpu_custom_call.1} parent=1 // loop_header_branch
      %18 = sbr.rel (%p16) target = $region8
    $region5: #{tpu_custom_call.1} parent=1 // loop_body
      %s20 = ssub.s32 %s15, 1
      %s21 = ssub.s32 %s15, 2
      %s22 = sadd.s32 %s15, 1
      %s23 = ssub.s32 %s15, %s22
      %p24 = scmp.eq.s32.totalorder %s23, 0
      %s26 = sadd.s32 %s25, 1
      %s27 = scalar_select %p24, %s25, %s26
      %p30 = pneg %p24
      %p31 = scmp.eq.s32.totalorder %s15, 1
      %p32 = por %p30, %p31
      %p33 = scmp.ne.s32.totalorder %s25, %s28
      %p34 = scmp.eq.s32.totalorder %s15, 0
      %p35 = por %p33, %p34
      %p36 = scmp.ne.s32.totalorder %s25, %s28
      %p37 = scmp.eq.s32.totalorder %s20, 1
      %p38 = por %p36, %p37
      %p39 = scmp.ne.s32.totalorder %s28, %s29
      %p40 = scmp.eq.s32.totalorder %s20, 0
      %p41 = por %p39, %p40
      %p42 = scmp.ne.s32.totalorder %s28, %s29
      %p43 = scmp.eq.s32.totalorder %s21, 1
      %p44 = por %p42, %p43
      %p46 = scmp.ne.s32.totalorder %s29, %s45
      %p47 = scmp.eq.s32.totalorder %s21, 0
      %p48 = por %p46, %p47
      %s50 = sadd.s32 %s49, 1
      %p53 = scmp.eq.s32.totalorder %s15, 1
      %p54 = scmp.ne.s32.totalorder %s49, %s51
      %p55 = scmp.eq.s32.totalorder %s15, 0
      %p56 = por %p54, %p55
      %p57 = scmp.ne.s32.totalorder %s49, %s51
      %p58 = scmp.eq.s32.totalorder %s20, 1
      %p59 = por %p57, %p58
      %p60 = scmp.ne.s32.totalorder %s51, %s52
      %p61 = scmp.eq.s32.totalorder %s20, 0
      %p62 = por %p60, %p61
      %p63 = scmp.ne.s32.totalorder %s51, %s52
      %p64 = scmp.eq.s32.totalorder %s21, 1
      %p65 = por %p63, %p64
      %p67 = scmp.ne.s32.totalorder %s52, %s66
      %p68 = scmp.eq.s32.totalorder %s21, 0
      %p69 = por %p67, %p68
      %s70 = ssub.s32 %s15, %s22
      %p71 = scmp.eq.s32.totalorder %s70, 0
      %s73 = sadd.s32 %s72, 1
      %s74 = scalar_select %p71, %s72, %s73
      %p77 = pneg %p71
      %p78 = scmp.eq.s32.totalorder %s15, 1
      %p79 = por %p77, %p78
      %p80 = scmp.ne.s32.totalorder %s72, %s75
      %p81 = scmp.eq.s32.totalorder %s15, 0
      %p82 = por %p80, %p81
      %p83 = scmp.ne.s32.totalorder %s72, %s75
      %p84 = scmp.eq.s32.totalorder %s20, 1
      %p85 = por %p83, %p84
      %p86 = scmp.ne.s32.totalorder %s75, %s76
      %p87 = scmp.eq.s32.totalorder %s20, 0
      %p88 = por %p86, %p87
      %p89 = scmp.ne.s32.totalorder %s75, %s76
      %p90 = scmp.eq.s32.totalorder %s21, 1
      %p91 = por %p89, %p90
      %p93 = scmp.ne.s32.totalorder %s76, %s92
      %p94 = scmp.eq.s32.totalorder %s21, 0
      %p95 = por %p93, %p94
      %p96 = scmp.le.s32.totalorder 1, %s15
      %p97 = scmp.lt.s32.totalorder %s15, 3
      %p98 = pnand %p96, %p97
      %p99 = pneg %p98
      // Predicated region
      $region9: #{tpu_custom_call.1} parent=5 // pred_check
        _
      $region10: #{tpu_custom_call.1} parent=5 // pred_check_branch
        %101 = sbr.rel (%p98) target = $region12
      $region11: #{tpu_custom_call.1} parent=5 // pred_region
        %s102 = ssub.s32 %s15, 1
        // Predicated region
        $region13: #{tpu_custom_call.1} parent=11 // pred_check
          %p103 = pneg %p62
        $region14: #{tpu_custom_call.1} parent=11 // pred_check_branch
          %105 = sbr.rel (%p103) target = $region16
        $region15: #{tpu_custom_call.1} parent=11 // pred_region
          %s107 = ssub.s32 768, 768
          %108 = vsyncadd [#allocation6], %s107
          %s109 = sshll.u32 [#allocation5], 4
          %s110 = int_to_ptr.vmem [resolvable:$true] %s109
          %115 = dma.hbm_to_vmem [thread:$0]  %s1, 768, %s110, [#allocation6], 192, 192, 12
        $region16: #{tpu_custom_call.1} parent=11 // pred_fallthru
          _
      $region12: #{tpu_custom_call.1} parent=5 // pred_fallthru
        _
      %p116 = scmp.lt.s32.totalorder %s15, 2
      // Predicated region
      $region17: #{tpu_custom_call.1} parent=5 // pred_check
        %p117 = pneg %p116
      $region18: #{tpu_custom_call.1} parent=5 // pred_check_branch
        %119 = sbr.rel (%p117) target = $region20
      $region19: #{tpu_custom_call.1} parent=5 // pred_region
        // Predicated region
        $region21: #{tpu_custom_call.1} parent=19 // pred_check
          %p120 = pneg %p35
        $region22: #{tpu_custom_call.1} parent=19 // pred_check_branch
          %122 = sbr.rel (%p120) target = $region24
        $region23: #{tpu_custom_call.1} parent=19 // pred_region
          %s123 = sand.u32 %s25, 1
          %s124 = scalar_lea.sflag [#allocation3], %s123
          %s125 = sand.u32 %s25, 1
          %s126 = smul.addr %s125, 32
          %s127 = scalar_lea.vmem [#allocation2], %s126
          %s129 = ssub.s32 512, 512
          %130 = vsyncadd %s124, %s129
          %s131 = smul.addr %s15, 4
          %s132 = smul.addr %s131, 128
          %s133 = scalar_lea.hbm %s0, %s132
          %s134 = sshll.u32 %s127, 4
          %s135 = int_to_ptr.vmem [resolvable:$true] %s134
          %140 = dma.hbm_to_vmem [thread:$0]  %s133, 512, %s135, %s124, 128, 128, 8
        $region24: #{tpu_custom_call.1} parent=19 // pred_fallthru
          _
      $region20: #{tpu_custom_call.1} parent=5 // pred_fallthru
        _
      %p141 = scmp.le.s32.totalorder 1, %s15
      %p142 = scmp.lt.s32.totalorder %s15, 3
      %p143 = pnand %p141, %p142
      %p144 = pneg %p143
      // Predicated region
      $region25: #{tpu_custom_call.1} parent=5 // pred_check
        _
      $region26: #{tpu_custom_call.1} parent=5 // pred_check_branch
        %146 = sbr.rel (%p143) target = $region28
      $region27: #{tpu_custom_call.1} parent=5 // pred_region
        %s147 = ssub.s32 %s15, 1
        %s148 = sand.u32 %s28, 1
        %s149 = scalar_lea.sflag [#allocation3], %s148
        %s150 = sand.u32 %s28, 1
        %s151 = smul.addr %s150, 32
        %s152 = scalar_lea.vmem [#allocation2], %s151
        // Predicated region
        $region29: #{tpu_custom_call.1} parent=27 // pred_check
          %p153 = pneg %p41
        $region30: #{tpu_custom_call.1} parent=27 // pred_check_branch
          %155 = sbr.rel (%p153) target = $region32
        $region31: #{tpu_custom_call.1} parent=27 // pred_region
          %156 = dma.done %s149, 512
        $region32: #{tpu_custom_call.1} parent=27 // pred_fallthru
          _
        // Predicated region
        $region33: #{tpu_custom_call.1} parent=27 // pred_check
          %p157 = pneg %p62
        $region34: #{tpu_custom_call.1} parent=27 // pred_check_branch
          %159 = sbr.rel (%p157) target = $region36
        $region35: #{tpu_custom_call.1} parent=27 // pred_region
          %160 = dma.done [#allocation6], 768
        $region36: #{tpu_custom_call.1} parent=27 // pred_fallthru
          _
        %s161 = sand.u32 %s28, 1
        %s162 = scalar_lea.sflag [#allocation3], %s161
        %s163 = sand.u32 %s28, 1
        %s164 = smul.addr %s163, 32
        %s165 = scalar_lea.vmem [#allocation2], %s164
        %p166 = pneg %p41
        %p167 = pneg %p38
        %p168 = pneg %p62
        %p169 = pneg %p59
        %p170 = pneg %p88
        %p171 = pneg %p85
        %s172 = sand.u32 %s75, 1
        %s173 = scalar_lea.sflag [#allocation4], %s172
        %s174 = sand.u32 %s75, 1
        %s175 = scalar_lea.vmem [#allocation7], %s174
        %v177 = vld [vmem:[%s152] sm:$0xff]
        %v178 = vld [vmem:[%s152 + $0x8] sm:$0xff]
        %v179 = vld [vmem:[%s152 + $0x10] sm:$0xff]
        %v180 = vld [vmem:[%s152 + $0x18] sm:$0xff]
        %181 = vxpose.xlu0.b32.start [1/16] %v177, 128
        %182 = vxpose.xlu0.b32.cont [2/16] %v178, 128
        %183 = vxpose.xlu0.b32.cont [3/16] %v179, 128
        %184 = vxpose.xlu0.b32.cont [4/16] %v180, 128
        %185 = vxpose.xlu0.b32.cont [5/16] 0.0, 128
        %186 = vxpose.xlu0.b32.cont [6/16] 0.0, 128
        %187 = vxpose.xlu0.b32.cont [7/16] 0.0, 128
        %188 = vxpose.xlu0.b32.cont [8/16] 0.0, 128
        %189 = vxpose.xlu0.b32.cont [9/16] 0.0, 128
        %190 = vxpose.xlu0.b32.cont [10/16] 0.0, 128
        %191 = vxpose.xlu0.b32.cont [11/16] 0.0, 128
        %192 = vxpose.xlu0.b32.cont [12/16] 0.0, 128
        %193 = vxpose.xlu0.b32.cont [13/16] 0.0, 128
        %194 = vxpose.xlu0.b32.cont [14/16] 0.0, 128
        %195 = vxpose.xlu0.b32.cont [15/16] 0.0, 128
        %196 = vxpose.xlu0.b32.end [16/16] 0.0, 128
        %v197 = vpop.trf.xlu0
        %v198 = vpop.trf.xlu0
        %v199 = vpop.trf.xlu0
        %v200 = vpop.trf.xlu0
        %v201 = vpop.trf.xlu0
        %v202 = vpop.trf.xlu0
        %v203 = vpop.trf.xlu0
        %v204 = vpop.trf.xlu0
        %v205 = vpop.trf.xlu0
        %v206 = vpop.trf.xlu0
        %v207 = vpop.trf.xlu0
        %v208 = vpop.trf.xlu0
        %v209 = vpop.trf.xlu0
        %v210 = vpop.trf.xlu0
        %v211 = vpop.trf.xlu0
        %v212 = vpop.trf.xlu0
        %v213 = vmul.f32 %v197, %v197
        %v214 = vmul.f32 %v198, %v198
        %v215 = vmul.f32 %v199, %v199
        %v216 = vmul.f32 %v200, %v200
        %v217 = vmul.f32 %v201, %v201
        %v218 = vmul.f32 %v202, %v202
        %v219 = vmul.f32 %v203, %v203
        %v220 = vmul.f32 %v204, %v204
        %vm221 = vcmask 261120
        %v222 = vsel %vm221, %v213, 0.0
        %223 = vadd.xlane.f32.xlu0 %v222
        %v224 = vpop.xlane.xlu0 %223
        %v225 = vsel %vm221, %v214, 0.0
        %226 = vadd.xlane.f32.xlu0 %v225
        %v227 = vpop.xlane.xlu0 %226
        %v228 = vsel %vm221, %v215, 0.0
        %229 = vadd.xlane.f32.xlu0 %v228
        %v230 = vpop.xlane.xlu0 %229
        %v231 = vsel %vm221, %v216, 0.0
        %232 = vadd.xlane.f32.xlu0 %v231
        %v233 = vpop.xlane.xlu0 %232
        %v234 = vsel %vm221, %v217, 0.0
        %235 = vadd.xlane.f32.xlu0 %v234
        %v236 = vpop.xlane.xlu0 %235
        %v237 = vsel %vm221, %v218, 0.0
        %238 = vadd.xlane.f32.xlu0 %v237
        %v239 = vpop.xlane.xlu0 %238
        %v240 = vsel %vm221, %v219, 0.0
        %241 = vadd.xlane.f32.xlu0 %v240
        %v242 = vpop.xlane.xlu0 %241
        %v243 = vsel %vm221, %v220, 0.0
        %244 = vadd.xlane.f32.xlu0 %v243
        %v245 = vpop.xlane.xlu0 %244
        %v246 = vrsqrt.pop %v224
        %v247 = vrsqrt.pop %v227
        %v248 = vrsqrt.pop %v230
        %v249 = vrsqrt.pop %v233
        %v250 = vrsqrt.pop %v236
        %v251 = vrsqrt.pop %v239
        %v252 = vrsqrt.pop %v242
        %v253 = vrsqrt.pop %v245
        %v254 = vmul.f32 %v197, %v246
        %v255 = vmul.f32 %v198, %v247
        %v256 = vmul.f32 %v199, %v248
        %v257 = vmul.f32 %v200, %v249
        %v258 = vmul.f32 %v201, %v250
        %v259 = vmul.f32 %v202, %v251
        %v260 = vmul.f32 %v203, %v252
        %v261 = vmul.f32 %v204, %v253
        %v262 = vpack.c.bf16 %v255, %v254
        %v263 = vpack.c.bf16 %v257, %v256
        %v264 = vpack.c.bf16 %v259, %v258
        %v265 = vpack.c.bf16 %v261, %v260
        %v266 = vld [vmem:[#allocation5] sm:$0xff]
        %v267 = vld [vmem:[#allocation5 + $0x8] sm:$0xf]
        %v268 = vld [vmem:[#allocation5 + $0xc] sm:$0xff]
        %v269 = vld [vmem:[#allocation5 + $0x14] sm:$0xf]
        %v270 = vld [vmem:[#allocation5 + $0x18] sm:$0xff]
        %v271 = vld [vmem:[#allocation5 + $0x20] sm:$0xf]
        %v272 = vld [vmem:[#allocation5 + $0x24] sm:$0xff]
        %v273 = vld [vmem:[#allocation5 + $0x2c] sm:$0xf]
        %v282 = vunpack.c.l.b16 %v266
        %v283 = vunpack.c.h.b16 %v266
        %v284 = vunpack.c.l.b16 %v267
        %v285 = vunpack.c.l.b16 %v268
        %v286 = vunpack.c.h.b16 %v268
        %v287 = vunpack.c.l.b16 %v269
        %v288 = vunpack.c.l.b16 %v270
        %v289 = vunpack.c.h.b16 %v270
        %v290 = vunpack.c.l.b16 %v271
        %v291 = vunpack.c.l.b16 %v272
        %v292 = vunpack.c.h.b16 %v272
        %v293 = vunpack.c.l.b16 %v273
        %v294 = vpack.c.b16 %v285, %v282
        %v295 = vpack.c.b16 %v286, %v283
        %v296 = vpack.c.b16 %v287, %v284
        %v297 = vpack.c.b16 %v291, %v288
        %v298 = vpack.c.b16 %v292, %v289
        %v299 = vpack.c.b16 %v293, %v290
        %v307 = vsel %vm221, %v262, 0
        %v310 = vsel %vm221, %v263, 0
        %v313 = vsel %vm221, %v264, 0
        %v316 = vsel %vm221, %v265, 0
        %318 = vmatprep.subr.bf16.mxu0 0
        %319 = vmatpush1.bf16.msra.mxu0 0
        %320 = vmatprep.subr.bf16.mxu0 0
        %321 = vmatpush1.bf16.msra.mxu0 0
        %322 = vmatprep.subr.bf16.mxu0 0
        %323 = vmatpush1.bf16.msra.mxu0 0
        %324 = vmatprep.subr.bf16.mxu0 0
        %325 = vmatpush1.bf16.msra.mxu0 0
        %326 = vmatprep.subr.bf16.mxu0 0
        %327 = vmatpush1.bf16.msra.mxu0 0
        %328 = vmatprep.subr.bf16.mxu0 0
        %329 = vmatpush1.bf16.msra.mxu0 0
        %330 = vmatprep.subr.bf16.mxu0 %v298
        %331 = vmatpush1.bf16.msra.mxu0 %v297
        %332 = vmatprep.subr.bf16.mxu0 %v295
        %333 = vmatpush1.bf16.msra.mxu0 %v294
        %334 = vmatprep.subr.bf16.mxu0 0
        %335 = vmatpush2.bf16.msra.mxu0 0
        %336 = vmatprep.subr.bf16.mxu0 0
        %337 = vmatpush2.bf16.msra.mxu0 0
        %338 = vmatprep.subr.bf16.mxu0 0
        %339 = vmatpush2.bf16.msra.mxu0 0
        %340 = vmatprep.subr.bf16.mxu0 0
        %341 = vmatpush2.bf16.msra.mxu0 0
        %342 = vmatprep.subr.bf16.mxu0 0
        %343 = vmatpush2.bf16.msra.mxu0 0
        %344 = vmatprep.subr.bf16.mxu0 0
        %345 = vmatpush2.bf16.msra.mxu0 0
        %346 = vmatprep.subr.bf16.mxu0 0
        %347 = vmatpush2.bf16.msra.mxu0 0
        %348 = vmatprep.subr.bf16.mxu0 0
        %349 = vmatpush2.bf16.msra.mxu0 0
        %350 = vmatprep.mubr.bf16.mxu0 0
        %351 = vmatmul.mubr.bf16.gmra.mxu0 %v307
        %v352 = vpop.f32.mrf.mxu0
        %v353 = vadd.f32 0.0, %v352
        %v354 = vpop.f32.mrf.mxu0
        %v355 = vadd.f32 0.0, %v354
        %v356 = vpop.f32.mrf.mxu0
        %v357 = vadd.f32 0.0, %v356
        %v358 = vpop.f32.mrf.mxu0
        %v359 = vadd.f32 0.0, %v358
        %360 = vmatprep.mubr.bf16.mxu0 0
        %361 = vmatmul.mubr.bf16.gmra.mxu0 %v310
        %v362 = vpop.f32.mrf.mxu0
        %v363 = vadd.f32 0.0, %v362
        %v364 = vpop.f32.mrf.mxu0
        %v365 = vadd.f32 0.0, %v364
        %v366 = vpop.f32.mrf.mxu0
        %v367 = vadd.f32 0.0, %v366
        %v368 = vpop.f32.mrf.mxu0
        %v369 = vadd.f32 0.0, %v368
        %370 = vmatprep.mubr.bf16.mxu0 0
        %371 = vmatmul.mubr.bf16.gmra.mxu0 %v313
        %v372 = vpop.f32.mrf.mxu0
        %v373 = vadd.f32 0.0, %v372
        %v374 = vpop.f32.mrf.mxu0
        %v375 = vadd.f32 0.0, %v374
        %v376 = vpop.f32.mrf.mxu0
        %v377 = vadd.f32 0.0, %v376
        %v378 = vpop.f32.mrf.mxu0
        %v379 = vadd.f32 0.0, %v378
        %380 = vmatprep.mubr.bf16.mxu0 0
        %381 = vmatmul.mubr.bf16.gmra.mxu0 %v316
        %v382 = vpop.f32.mrf.mxu0
        %v383 = vadd.f32 0.0, %v382
        %v384 = vpop.f32.mrf.mxu0
        %v385 = vadd.f32 0.0, %v384
        %v386 = vpop.f32.mrf.mxu0
        %v387 = vadd.f32 0.0, %v386
        %v388 = vpop.f32.mrf.mxu0
        %v389 = vadd.f32 0.0, %v388
        %390 = vdwg.mxu0
        %391 = vmatprep.subr.bf16.mxu0 0
        %392 = vmatpush1.bf16.msra.mxu0 0
        %393 = vmatprep.subr.bf16.mxu0 0
        %394 = vmatpush1.bf16.msra.mxu0 0
        %395 = vmatprep.subr.bf16.mxu0 0
        %396 = vmatpush1.bf16.msra.mxu0 0
        %397 = vmatprep.subr.bf16.mxu0 0
        %398 = vmatpush1.bf16.msra.mxu0 0
        %399 = vmatprep.subr.bf16.mxu0 0
        %400 = vmatpush1.bf16.msra.mxu0 0
        %401 = vmatprep.subr.bf16.mxu0 0
        %402 = vmatpush1.bf16.msra.mxu0 0
        %403 = vmatprep.subr.bf16.mxu0 0
        %404 = vmatpush1.bf16.msra.mxu0 %v299
        %405 = vmatprep.subr.bf16.mxu0 0
        %406 = vmatpush1.bf16.msra.mxu0 %v296
        %407 = vmatprep.subr.bf16.mxu0 0
        %408 = vmatpush2.bf16.msra.mxu0 0
        %409 = vmatprep.subr.bf16.mxu0 0
        %410 = vmatpush2.bf16.msra.mxu0 0
        %411 = vmatprep.subr.bf16.mxu0 0
        %412 = vmatpush2.bf16.msra.mxu0 0
        %413 = vmatprep.subr.bf16.mxu0 0
        %414 = vmatpush2.bf16.msra.mxu0 0
        %415 = vmatprep.subr.bf16.mxu0 0
        %416 = vmatpush2.bf16.msra.mxu0 0
        %417 = vmatprep.subr.bf16.mxu0 0
        %418 = vmatpush2.bf16.msra.mxu0 0
        %419 = vmatprep.subr.bf16.mxu0 0
        %420 = vmatpush2.bf16.msra.mxu0 0
        %421 = vmatprep.subr.bf16.mxu0 0
        %422 = vmatpush2.bf16.msra.mxu0 0
        %423 = vmatprep.mubr.bf16.mxu0 0
        %424 = vmatmul.mubr.bf16.gmra.mxu0 %v307
        %v425 = vpop.f32.mrf.mxu0
        %v426 = vadd.f32 0.0, %v425
        %v427 = vpop.f32.mrf.mxu0
        %v428 = vpop.f32.mrf.mxu0
        %v429 = vadd.f32 0.0, %v428
        %v430 = vpop.f32.mrf.mxu0
        %431 = vmatprep.mubr.bf16.mxu0 0
        %432 = vmatmul.mubr.bf16.gmra.mxu0 %v310
        %v433 = vpop.f32.mrf.mxu0
        %v434 = vadd.f32 0.0, %v433
        %v435 = vpop.f32.mrf.mxu0
        %v436 = vpop.f32.mrf.mxu0
        %v437 = vadd.f32 0.0, %v436
        %v438 = vpop.f32.mrf.mxu0
        %439 = vmatprep.mubr.bf16.mxu0 0
        %440 = vmatmul.mubr.bf16.gmra.mxu0 %v313
        %v441 = vpop.f32.mrf.mxu0
        %v442 = vadd.f32 0.0, %v441
        %v443 = vpop.f32.mrf.mxu0
        %v444 = vpop.f32.mrf.mxu0
        %v445 = vadd.f32 0.0, %v444
        %v446 = vpop.f32.mrf.mxu0
        %447 = vmatprep.mubr.bf16.mxu0 0
        %448 = vmatmul.mubr.bf16.gmra.mxu0 %v316
        %v449 = vpop.f32.mrf.mxu0
        %v450 = vadd.f32 0.0, %v449
        %v451 = vpop.f32.mrf.mxu0
        %v452 = vpop.f32.mrf.mxu0
        %v453 = vadd.f32 0.0, %v452
        %v454 = vpop.f32.mrf.mxu0
        %455 = vdwg.mxu0
        %v456 = vlaneseq
        %v457 = vand.u32 %v456, 127
        %vm458 = vcmask 523264
        %v459 = vsel %vm458, %v353, -inf
        %460 = vmax.xlane.f32.xlu0 %v459
        %v461 = vpop.xlane.xlu0 %460
        %v462 = vsel %vm458, %v357, -inf
        %463 = vmax.xlane.f32.xlu0 %v462
        %v464 = vpop.xlane.xlu0 %463
        %v465 = vsel %vm458, %v363, -inf
        %466 = vmax.xlane.f32.xlu0 %v465
        %v467 = vpop.xlane.xlu0 %466
        %v468 = vsel %vm458, %v367, -inf
        %469 = vmax.xlane.f32.xlu0 %v468
        %v470 = vpop.xlane.xlu0 %469
        %v471 = vsel %vm458, %v373, -inf
        %472 = vmax.xlane.f32.xlu0 %v471
        %v473 = vpop.xlane.xlu0 %472
        %v474 = vsel %vm458, %v377, -inf
        %475 = vmax.xlane.f32.xlu0 %v474
        %v476 = vpop.xlane.xlu0 %475
        %v477 = vsel %vm458, %v383, -inf
        %478 = vmax.xlane.f32.xlu0 %v477
        %v479 = vpop.xlane.xlu0 %478
        %v480 = vsel %vm458, %v387, -inf
        %481 = vmax.xlane.f32.xlu0 %v480
        %v482 = vpop.xlane.xlu0 %481
        %v483 = vadd.f32 %v461, 0.0
        %v484 = vadd.f32 %v464, 0.0
        %v485 = vadd.f32 %v467, 0.0
        %v486 = vadd.f32 %v470, 0.0
        %v487 = vadd.f32 %v473, 0.0
        %v488 = vadd.f32 %v476, 0.0
        %v489 = vadd.f32 %v479, 0.0
        %v490 = vadd.f32 %v482, 0.0
        %vm491 = vcmp.eq.f32.partialorder %v353, %v461
        %vm492 = vcmp.eq.f32.partialorder %v357, %v464
        %vm493 = vcmp.eq.f32.partialorder %v363, %v467
        %vm494 = vcmp.eq.f32.partialorder %v367, %v470
        %vm495 = vcmp.eq.f32.partialorder %v373, %v473
        %vm496 = vcmp.eq.f32.partialorder %v377, %v476
        %vm497 = vcmp.eq.f32.partialorder %v383, %v479
        %vm498 = vcmp.eq.f32.partialorder %v387, %v482
        %v499 = vsel %vm491, %v457, 64
        %v500 = vsel %vm492, %v457, 64
        %v501 = vsel %vm493, %v457, 64
        %v502 = vsel %vm494, %v457, 64
        %v503 = vsel %vm495, %v457, 64
        %v504 = vsel %vm496, %v457, 64
        %v505 = vsel %vm497, %v457, 64
        %v506 = vsel %vm498, %v457, 64
        %v507 = vsel %vm458, %v499, 2147483647
        %v508 = vand.u32 %v507, 65535
        %v509 = vshra.s32 %v507, 16
        %v510 = vcvt.s32.f32 %v508
        %v511 = vcvt.s32.f32 %v509
        %512 = vmin.xlane.f32.xlu0 %v511
        %v513 = vpop.xlane.xlu0 %512
        %vm514 = vcmp.eq.f32.partialorder %v511, %v513
        %v515 = vsel %vm514, %v510, inf
        %516 = vmin.xlane.f32.xlu0 %v515
        %v517 = vpop.xlane.xlu0 %516
        %v518 = vcvt.f32.s32 %v517
        %v519 = vcvt.f32.s32 %v513
        %v520 = vshll.u32 %v519, 16
        %v521 = vadd.s32 %v520, %v518
        %v522 = vsel %vm458, %v500, 2147483647
        %v523 = vand.u32 %v522, 65535
        %v524 = vshra.s32 %v522, 16
        %v525 = vcvt.s32.f32 %v523
        %v526 = vcvt.s32.f32 %v524
        %527 = vmin.xlane.f32.xlu0 %v526
        %v528 = vpop.xlane.xlu0 %527
        %vm529 = vcmp.eq.f32.partialorder %v526, %v528
        %v530 = vsel %vm529, %v525, inf
        %531 = vmin.xlane.f32.xlu0 %v530
        %v532 = vpop.xlane.xlu0 %531
        %v533 = vcvt.f32.s32 %v532
        %v534 = vcvt.f32.s32 %v528
        %v535 = vshll.u32 %v534, 16
        %v536 = vadd.s32 %v535, %v533
        %v537 = vsel %vm458, %v501, 2147483647
        %v538 = vand.u32 %v537, 65535
        %v539 = vshra.s32 %v537, 16
        %v540 = vcvt.s32.f32 %v538
        %v541 = vcvt.s32.f32 %v539
        %542 = vmin.xlane.f32.xlu0 %v541
        %v543 = vpop.xlane.xlu0 %542
        %vm544 = vcmp.eq.f32.partialorder %v541, %v543
        %v545 = vsel %vm544, %v540, inf
        %546 = vmin.xlane.f32.xlu0 %v545
        %v547 = vpop.xlane.xlu0 %546
        %v548 = vcvt.f32.s32 %v547
        %v549 = vcvt.f32.s32 %v543
        %v550 = vshll.u32 %v549, 16
        %v551 = vadd.s32 %v550, %v548
        %v552 = vsel %vm458, %v502, 2147483647
        %v553 = vand.u32 %v552, 65535
        %v554 = vshra.s32 %v552, 16
        %v555 = vcvt.s32.f32 %v553
        %v556 = vcvt.s32.f32 %v554
        %557 = vmin.xlane.f32.xlu0 %v556
        %v558 = vpop.xlane.xlu0 %557
        %vm559 = vcmp.eq.f32.partialorder %v556, %v558
        %v560 = vsel %vm559, %v555, inf
        %561 = vmin.xlane.f32.xlu0 %v560
        %v562 = vpop.xlane.xlu0 %561
        %v563 = vcvt.f32.s32 %v562
        %v564 = vcvt.f32.s32 %v558
        %v565 = vshll.u32 %v564, 16
        %v566 = vadd.s32 %v565, %v563
        %v567 = vsel %vm458, %v503, 2147483647
        %v568 = vand.u32 %v567, 65535
        %v569 = vshra.s32 %v567, 16
        %v570 = vcvt.s32.f32 %v568
        %v571 = vcvt.s32.f32 %v569
        %572 = vmin.xlane.f32.xlu0 %v571
        %v573 = vpop.xlane.xlu0 %572
        %vm574 = vcmp.eq.f32.partialorder %v571, %v573
        %v575 = vsel %vm574, %v570, inf
        %576 = vmin.xlane.f32.xlu0 %v575
        %v577 = vpop.xlane.xlu0 %576
        %v578 = vcvt.f32.s32 %v577
        %v579 = vcvt.f32.s32 %v573
        %v580 = vshll.u32 %v579, 16
        %v581 = vadd.s32 %v580, %v578
        %v582 = vsel %vm458, %v504, 2147483647
        %v583 = vand.u32 %v582, 65535
        %v584 = vshra.s32 %v582, 16
        %v585 = vcvt.s32.f32 %v583
        %v586 = vcvt.s32.f32 %v584
        %587 = vmin.xlane.f32.xlu0 %v586
        %v588 = vpop.xlane.xlu0 %587
        %vm589 = vcmp.eq.f32.partialorder %v586, %v588
        %v590 = vsel %vm589, %v585, inf
        %591 = vmin.xlane.f32.xlu0 %v590
        %v592 = vpop.xlane.xlu0 %591
        %v593 = vcvt.f32.s32 %v592
        %v594 = vcvt.f32.s32 %v588
        %v595 = vshll.u32 %v594, 16
        %v596 = vadd.s32 %v595, %v593
        %v597 = vsel %vm458, %v505, 2147483647
        %v598 = vand.u32 %v597, 65535
        %v599 = vshra.s32 %v597, 16
        %v600 = vcvt.s32.f32 %v598
        %v601 = vcvt.s32.f32 %v599
        %602 = vmin.xlane.f32.xlu0 %v601
        %v603 = vpop.xlane.xlu0 %602
        %vm604 = vcmp.eq.f32.partialorder %v601, %v603
        %v605 = vsel %vm604, %v600, inf
        %606 = vmin.xlane.f32.xlu0 %v605
        %v607 = vpop.xlane.xlu0 %606
        %v608 = vcvt.f32.s32 %v607
        %v609 = vcvt.f32.s32 %v603
        %v610 = vshll.u32 %v609, 16
        %v611 = vadd.s32 %v610, %v608
        %v612 = vsel %vm458, %v506, 2147483647
        %v613 = vand.u32 %v612, 65535
        %v614 = vshra.s32 %v612, 16
        %v615 = vcvt.s32.f32 %v613
        %v616 = vcvt.s32.f32 %v614
        %617 = vmin.xlane.f32.xlu0 %v616
        %v618 = vpop.xlane.xlu0 %617
        %vm619 = vcmp.eq.f32.partialorder %v616, %v618
        %v620 = vsel %vm619, %v615, inf
        %621 = vmin.xlane.f32.xlu0 %v620
        %v622 = vpop.xlane.xlu0 %621
        %v623 = vcvt.f32.s32 %v622
        %v624 = vcvt.f32.s32 %v618
        %v625 = vshll.u32 %v624, 16
        %v626 = vadd.s32 %v625, %v623
        %vm627 = vcmp.eq.s32.totalorder %v457, %v521
        %vm628 = vcmp.eq.s32.totalorder %v457, %v536
        %vm629 = vcmp.eq.s32.totalorder %v457, %v551
        %vm630 = vcmp.eq.s32.totalorder %v457, %v566
        %vm631 = vcmp.eq.s32.totalorder %v457, %v581
        %vm632 = vcmp.eq.s32.totalorder %v457, %v596
        %vm633 = vcmp.eq.s32.totalorder %v457, %v611
        %vm634 = vcmp.eq.s32.totalorder %v457, %v626
        %v635 = vsel %vm627, -inf, %v353
        %v636 = vsel %vm628, -inf, %v357
        %v637 = vsel %vm629, -inf, %v363
        %v638 = vsel %vm630, -inf, %v367
        %v639 = vsel %vm631, -inf, %v373
        %v640 = vsel %vm632, -inf, %v377
        %v641 = vsel %vm633, -inf, %v383
        %v642 = vsel %vm634, -inf, %v387
        %v643 = vsel %vm458, %v635, -inf
        %644 = vmax.xlane.f32.xlu0 %v643
        %v645 = vpop.xlane.xlu0 %644
        %v646 = vsel %vm458, %v636, -inf
        %647 = vmax.xlane.f32.xlu0 %v646
        %v648 = vpop.xlane.xlu0 %647
        %v649 = vsel %vm458, %v637, -inf
        %650 = vmax.xlane.f32.xlu0 %v649
        %v651 = vpop.xlane.xlu0 %650
        %v652 = vsel %vm458, %v638, -inf
        %653 = vmax.xlane.f32.xlu0 %v652
        %v654 = vpop.xlane.xlu0 %653
        %v655 = vsel %vm458, %v639, -inf
        %656 = vmax.xlane.f32.xlu0 %v655
        %v657 = vpop.xlane.xlu0 %656
        %v658 = vsel %vm458, %v640, -inf
        %659 = vmax.xlane.f32.xlu0 %v658
        %v660 = vpop.xlane.xlu0 %659
        %v661 = vsel %vm458, %v641, -inf
        %662 = vmax.xlane.f32.xlu0 %v661
        %v663 = vpop.xlane.xlu0 %662
        %v664 = vsel %vm458, %v642, -inf
        %665 = vmax.xlane.f32.xlu0 %v664
        %v666 = vpop.xlane.xlu0 %665
        %v667 = vadd.f32 %v483, %v645
        %v668 = vadd.f32 %v484, %v648
        %v669 = vadd.f32 %v485, %v651
        %v670 = vadd.f32 %v486, %v654
        %v671 = vadd.f32 %v487, %v657
        %v672 = vadd.f32 %v488, %v660
        %v673 = vadd.f32 %v489, %v663
        %v674 = vadd.f32 %v490, %v666
        %vm675 = vcmp.eq.f32.partialorder %v635, %v645
        %vm676 = vcmp.eq.f32.partialorder %v636, %v648
        %vm677 = vcmp.eq.f32.partialorder %v637, %v651
        %vm678 = vcmp.eq.f32.partialorder %v638, %v654
        %vm679 = vcmp.eq.f32.partialorder %v639, %v657
        %vm680 = vcmp.eq.f32.partialorder %v640, %v660
        %vm681 = vcmp.eq.f32.partialorder %v641, %v663
        %vm682 = vcmp.eq.f32.partialorder %v642, %v666
        %v683 = vsel %vm675, %v457, 64
        %v684 = vsel %vm676, %v457, 64
        %v685 = vsel %vm677, %v457, 64
        %v686 = vsel %vm678, %v457, 64
        %v687 = vsel %vm679, %v457, 64
        %v688 = vsel %vm680, %v457, 64
        %v689 = vsel %vm681, %v457, 64
        %v690 = vsel %vm682, %v457, 64
        %v691 = vsel %vm458, %v683, 2147483647
        %v692 = vand.u32 %v691, 65535
        %v693 = vshra.s32 %v691, 16
        %v694 = vcvt.s32.f32 %v692
        %v695 = vcvt.s32.f32 %v693
        %696 = vmin.xlane.f32.xlu0 %v695
        %v697 = vpop.xlane.xlu0 %696
        %vm698 = vcmp.eq.f32.partialorder %v695, %v697
        %v699 = vsel %vm698, %v694, inf
        %700 = vmin.xlane.f32.xlu0 %v699
        %v701 = vpop.xlane.xlu0 %700
        %v702 = vcvt.f32.s32 %v701
        %v703 = vcvt.f32.s32 %v697
        %v704 = vshll.u32 %v703, 16
        %v705 = vadd.s32 %v704, %v702
        %v706 = vsel %vm458, %v684, 2147483647
        %v707 = vand.u32 %v706, 65535
        %v708 = vshra.s32 %v706, 16
        %v709 = vcvt.s32.f32 %v707
        %v710 = vcvt.s32.f32 %v708
        %711 = vmin.xlane.f32.xlu0 %v710
        %v712 = vpop.xlane.xlu0 %711
        %vm713 = vcmp.eq.f32.partialorder %v710, %v712
        %v714 = vsel %vm713, %v709, inf
        %715 = vmin.xlane.f32.xlu0 %v714
        %v716 = vpop.xlane.xlu0 %715
        %v717 = vcvt.f32.s32 %v716
        %v718 = vcvt.f32.s32 %v712
        %v719 = vshll.u32 %v718, 16
        %v720 = vadd.s32 %v719, %v717
        %v721 = vsel %vm458, %v685, 2147483647
        %v722 = vand.u32 %v721, 65535
        %v723 = vshra.s32 %v721, 16
        %v724 = vcvt.s32.f32 %v722
        %v725 = vcvt.s32.f32 %v723
        %726 = vmin.xlane.f32.xlu0 %v725
        %v727 = vpop.xlane.xlu0 %726
        %vm728 = vcmp.eq.f32.partialorder %v725, %v727
        %v729 = vsel %vm728, %v724, inf
        %730 = vmin.xlane.f32.xlu0 %v729
        %v731 = vpop.xlane.xlu0 %730
        %v732 = vcvt.f32.s32 %v731
        %v733 = vcvt.f32.s32 %v727
        %v734 = vshll.u32 %v733, 16
        %v735 = vadd.s32 %v734, %v732
        %v736 = vsel %vm458, %v686, 2147483647
        %v737 = vand.u32 %v736, 65535
        %v738 = vshra.s32 %v736, 16
        %v739 = vcvt.s32.f32 %v737
        %v740 = vcvt.s32.f32 %v738
        %741 = vmin.xlane.f32.xlu0 %v740
        %v742 = vpop.xlane.xlu0 %741
        %vm743 = vcmp.eq.f32.partialorder %v740, %v742
        %v744 = vsel %vm743, %v739, inf
        %745 = vmin.xlane.f32.xlu0 %v744
        %v746 = vpop.xlane.xlu0 %745
        %v747 = vcvt.f32.s32 %v746
        %v748 = vcvt.f32.s32 %v742
        %v749 = vshll.u32 %v748, 16
        %v750 = vadd.s32 %v749, %v747
        %v751 = vsel %vm458, %v687, 2147483647
        %v752 = vand.u32 %v751, 65535
        %v753 = vshra.s32 %v751, 16
        %v754 = vcvt.s32.f32 %v752
        %v755 = vcvt.s32.f32 %v753
        %756 = vmin.xlane.f32.xlu0 %v755
        %v757 = vpop.xlane.xlu0 %756
        %vm758 = vcmp.eq.f32.partialorder %v755, %v757
        %v759 = vsel %vm758, %v754, inf
        %760 = vmin.xlane.f32.xlu0 %v759
        %v761 = vpop.xlane.xlu0 %760
        %v762 = vcvt.f32.s32 %v761
        %v763 = vcvt.f32.s32 %v757
        %v764 = vshll.u32 %v763, 16
        %v765 = vadd.s32 %v764, %v762
        %v766 = vsel %vm458, %v688, 2147483647
        %v767 = vand.u32 %v766, 65535
        %v768 = vshra.s32 %v766, 16
        %v769 = vcvt.s32.f32 %v767
        %v770 = vcvt.s32.f32 %v768
        %771 = vmin.xlane.f32.xlu0 %v770
        %v772 = vpop.xlane.xlu0 %771
        %vm773 = vcmp.eq.f32.partialorder %v770, %v772
        %v774 = vsel %vm773, %v769, inf
        %775 = vmin.xlane.f32.xlu0 %v774
        %v776 = vpop.xlane.xlu0 %775
        %v777 = vcvt.f32.s32 %v776
        %v778 = vcvt.f32.s32 %v772
        %v779 = vshll.u32 %v778, 16
        %v780 = vadd.s32 %v779, %v777
        %v781 = vsel %vm458, %v689, 2147483647
        %v782 = vand.u32 %v781, 65535
        %v783 = vshra.s32 %v781, 16
        %v784 = vcvt.s32.f32 %v782
        %v785 = vcvt.s32.f32 %v783
        %786 = vmin.xlane.f32.xlu0 %v785
        %v787 = vpop.xlane.xlu0 %786
        %vm788 = vcmp.eq.f32.partialorder %v785, %v787
        %v789 = vsel %vm788, %v784, inf
        %790 = vmin.xlane.f32.xlu0 %v789
        %v791 = vpop.xlane.xlu0 %790
        %v792 = vcvt.f32.s32 %v791
        %v793 = vcvt.f32.s32 %v787
        %v794 = vshll.u32 %v793, 16
        %v795 = vadd.s32 %v794, %v792
        %v796 = vsel %vm458, %v690, 2147483647
        %v797 = vand.u32 %v796, 65535
        %v798 = vshra.s32 %v796, 16
        %v799 = vcvt.s32.f32 %v797
        %v800 = vcvt.s32.f32 %v798
        %801 = vmin.xlane.f32.xlu0 %v800
        %v802 = vpop.xlane.xlu0 %801
        %vm803 = vcmp.eq.f32.partialorder %v800, %v802
        %v804 = vsel %vm803, %v799, inf
        %805 = vmin.xlane.f32.xlu0 %v804
        %v806 = vpop.xlane.xlu0 %805
        %v807 = vcvt.f32.s32 %v806
        %v808 = vcvt.f32.s32 %v802
        %v809 = vshll.u32 %v808, 16
        %v810 = vadd.s32 %v809, %v807
        %vm811 = vcmp.eq.s32.totalorder %v457, %v705
        %vm812 = vcmp.eq.s32.totalorder %v457, %v720
        %vm813 = vcmp.eq.s32.totalorder %v457, %v735
        %vm814 = vcmp.eq.s32.totalorder %v457, %v750
        %vm815 = vcmp.eq.s32.totalorder %v457, %v765
        %vm816 = vcmp.eq.s32.totalorder %v457, %v780
        %vm817 = vcmp.eq.s32.totalorder %v457, %v795
        %vm818 = vcmp.eq.s32.totalorder %v457, %v810
        %v819 = vsel %vm811, -inf, %v635
        %v820 = vsel %vm812, -inf, %v636
        %v821 = vsel %vm813, -inf, %v637
        %v822 = vsel %vm814, -inf, %v638
        %v823 = vsel %vm815, -inf, %v639
        %v824 = vsel %vm816, -inf, %v640
        %v825 = vsel %vm817, -inf, %v641
        %v826 = vsel %vm818, -inf, %v642
        %v827 = vsel %vm458, %v819, -inf
        %828 = vmax.xlane.f32.xlu0 %v827
        %v829 = vpop.xlane.xlu0 %828
        %v830 = vsel %vm458, %v820, -inf
        %831 = vmax.xlane.f32.xlu0 %v830
        %v832 = vpop.xlane.xlu0 %831
        %v833 = vsel %vm458, %v821, -inf
        %834 = vmax.xlane.f32.xlu0 %v833
        %v835 = vpop.xlane.xlu0 %834
        %v836 = vsel %vm458, %v822, -inf
        %837 = vmax.xlane.f32.xlu0 %v836
        %v838 = vpop.xlane.xlu0 %837
        %v839 = vsel %vm458, %v823, -inf
        %840 = vmax.xlane.f32.xlu0 %v839
        %v841 = vpop.xlane.xlu0 %840
        %v842 = vsel %vm458, %v824, -inf
        %843 = vmax.xlane.f32.xlu0 %v842
        %v844 = vpop.xlane.xlu0 %843
        %v845 = vsel %vm458, %v825, -inf
        %846 = vmax.xlane.f32.xlu0 %v845
        %v847 = vpop.xlane.xlu0 %846
        %v848 = vsel %vm458, %v826, -inf
        %849 = vmax.xlane.f32.xlu0 %v848
        %v850 = vpop.xlane.xlu0 %849
        %v851 = vadd.f32 %v667, %v829
        %v852 = vadd.f32 %v668, %v832
        %v853 = vadd.f32 %v669, %v835
        %v854 = vadd.f32 %v670, %v838
        %v855 = vadd.f32 %v671, %v841
        %v856 = vadd.f32 %v672, %v844
        %v857 = vadd.f32 %v673, %v847
        %v858 = vadd.f32 %v674, %v850
        %vm859 = vcmask 7168
        %v860 = vsel %vm859, %v851, 0.0
        %v861 = vsel %vm859, %v852, 0.0
        %v862 = vadd.f32 %v860, %v861
        %v863 = vsel %vm859, %v853, 0.0
        %v864 = vadd.f32 %v862, %v863
        %v865 = vsel %vm859, %v854, 0.0
        %v866 = vadd.f32 %v864, %v865
        %v867 = vsel %vm859, %v855, 0.0
        %v868 = vadd.f32 %v866, %v867
        %v869 = vsel %vm859, %v856, 0.0
        %v870 = vadd.f32 %v868, %v869
        %v871 = vsel %vm859, %v857, 0.0
        %v872 = vadd.f32 %v870, %v871
        %v873 = vsel %vm859, %v858, 0.0
        %v874 = vadd.f32 %v872, %v873
        %875 = vadd.xlane.f32.xlu0 %v874
        %v876 = vpop.xlane.xlu0 %875
        %v877 = vrot.slane %v876, 4
        %v878 = vadd.f32 %v876, %v877
        %v879 = vrot.slane %v878, 2
        %v880 = vadd.f32 %v878, %v879
        %v881 = vrot.slane %v880, 1
        %v882 = vadd.f32 %v880, %v881
        %s883 = vtos %v882
        %vm884 = vcmp.eq.s32.totalorder %v457, 0
        %v885 = vstv %s883
        %v886 = vsel %vm884, %v885, 0.0
        %v887 = vadd.f32 %v886, 0.0
        %vm888 = vcmask 1048064
        %v889 = vsel %vm888, %v353, -inf
        %890 = vmax.xlane.f32.xlu0 %v889
        %v891 = vpop.xlane.xlu0 %890
        %v892 = vsel %vm888, %v357, -inf
        %893 = vmax.xlane.f32.xlu0 %v892
        %v894 = vpop.xlane.xlu0 %893
        %v895 = vsel %vm888, %v363, -inf
        %896 = vmax.xlane.f32.xlu0 %v895
        %v897 = vpop.xlane.xlu0 %896
        %v898 = vsel %vm888, %v367, -inf
        %899 = vmax.xlane.f32.xlu0 %v898
        %v900 = vpop.xlane.xlu0 %899
        %v901 = vsel %vm888, %v373, -inf
        %902 = vmax.xlane.f32.xlu0 %v901
        %v903 = vpop.xlane.xlu0 %902
        %v904 = vsel %vm888, %v377, -inf
        %905 = vmax.xlane.f32.xlu0 %v904
        %v906 = vpop.xlane.xlu0 %905
        %v907 = vsel %vm888, %v383, -inf
        %908 = vmax.xlane.f32.xlu0 %v907
        %v909 = vpop.xlane.xlu0 %908
        %v910 = vsel %vm888, %v387, -inf
        %911 = vmax.xlane.f32.xlu0 %v910
        %v912 = vpop.xlane.xlu0 %911
        %v913 = vadd.f32 %v891, 0.0
        %v914 = vadd.f32 %v894, 0.0
        %v915 = vadd.f32 %v897, 0.0
        %v916 = vadd.f32 %v900, 0.0
        %v917 = vadd.f32 %v903, 0.0
        %v918 = vadd.f32 %v906, 0.0
        %v919 = vadd.f32 %v909, 0.0
        %v920 = vadd.f32 %v912, 0.0
        %vm921 = vcmp.eq.f32.partialorder %v353, %v891
        %vm922 = vcmp.eq.f32.partialorder %v357, %v894
        %vm923 = vcmp.eq.f32.partialorder %v363, %v897
        %vm924 = vcmp.eq.f32.partialorder %v367, %v900
        %vm925 = vcmp.eq.f32.partialorder %v373, %v903
        %vm926 = vcmp.eq.f32.partialorder %v377, %v906
        %vm927 = vcmp.eq.f32.partialorder %v383, %v909
        %vm928 = vcmp.eq.f32.partialorder %v387, %v912
        %929 = vrot.lane.b32.xlu0 %v457, 64
        %v930 = vpop.permute.xlu0 %929
        %v931 = vsel %vm921, %v930, 64
        %v932 = vsel %vm922, %v930, 64
        %v933 = vsel %vm923, %v930, 64
        %v934 = vsel %vm924, %v930, 64
        %v935 = vsel %vm925, %v930, 64
        %v936 = vsel %vm926, %v930, 64
        %v937 = vsel %vm927, %v930, 64
        %v938 = vsel %vm928, %v930, 64
        %v939 = vsel %vm888, %v931, 2147483647
        %v940 = vand.u32 %v939, 65535
        %v941 = vshra.s32 %v939, 16
        %v942 = vcvt.s32.f32 %v940
        %v943 = vcvt.s32.f32 %v941
        %944 = vmin.xlane.f32.xlu0 %v943
        %v945 = vpop.xlane.xlu0 %944
        %vm946 = vcmp.eq.f32.partialorder %v943, %v945
        %v947 = vsel %vm946, %v942, inf
        %948 = vmin.xlane.f32.xlu0 %v947
        %v949 = vpop.xlane.xlu0 %948
        %v950 = vcvt.f32.s32 %v949
        %v951 = vcvt.f32.s32 %v945
        %v952 = vshll.u32 %v951, 16
        %v953 = vadd.s32 %v952, %v950
        %v954 = vsel %vm888, %v932, 2147483647
        %v955 = vand.u32 %v954, 65535
        %v956 = vshra.s32 %v954, 16
        %v957 = vcvt.s32.f32 %v955
        %v958 = vcvt.s32.f32 %v956
        %959 = vmin.xlane.f32.xlu0 %v958
        %v960 = vpop.xlane.xlu0 %959
        %vm961 = vcmp.eq.f32.partialorder %v958, %v960
        %v962 = vsel %vm961, %v957, inf
        %963 = vmin.xlane.f32.xlu0 %v962
        %v964 = vpop.xlane.xlu0 %963
        %v965 = vcvt.f32.s32 %v964
        %v966 = vcvt.f32.s32 %v960
        %v967 = vshll.u32 %v966, 16
        %v968 = vadd.s32 %v967, %v965
        %v969 = vsel %vm888, %v933, 2147483647
        %v970 = vand.u32 %v969, 65535
        %v971 = vshra.s32 %v969, 16
        %v972 = vcvt.s32.f32 %v970
        %v973 = vcvt.s32.f32 %v971
        %974 = vmin.xlane.f32.xlu0 %v973
        %v975 = vpop.xlane.xlu0 %974
        %vm976 = vcmp.eq.f32.partialorder %v973, %v975
        %v977 = vsel %vm976, %v972, inf
        %978 = vmin.xlane.f32.xlu0 %v977
        %v979 = vpop.xlane.xlu0 %978
        %v980 = vcvt.f32.s32 %v979
        %v981 = vcvt.f32.s32 %v975
        %v982 = vshll.u32 %v981, 16
        %v983 = vadd.s32 %v982, %v980
        %v984 = vsel %vm888, %v934, 2147483647
        %v985 = vand.u32 %v984, 65535
        %v986 = vshra.s32 %v984, 16
        %v987 = vcvt.s32.f32 %v985
        %v988 = vcvt.s32.f32 %v986
        %989 = vmin.xlane.f32.xlu0 %v988
        %v990 = vpop.xlane.xlu0 %989
        %vm991 = vcmp.eq.f32.partialorder %v988, %v990
        %v992 = vsel %vm991, %v987, inf
        %993 = vmin.xlane.f32.xlu0 %v992
        %v994 = vpop.xlane.xlu0 %993
        %v995 = vcvt.f32.s32 %v994
        %v996 = vcvt.f32.s32 %v990
        %v997 = vshll.u32 %v996, 16
        %v998 = vadd.s32 %v997, %v995
        %v999 = vsel %vm888, %v935, 2147483647
        %v1000 = vand.u32 %v999, 65535
        %v1001 = vshra.s32 %v999, 16
        %v1002 = vcvt.s32.f32 %v1000
        %v1003 = vcvt.s32.f32 %v1001
        %1004 = vmin.xlane.f32.xlu0 %v1003
        %v1005 = vpop.xlane.xlu0 %1004
        %vm1006 = vcmp.eq.f32.partialorder %v1003, %v1005
        %v1007 = vsel %vm1006, %v1002, inf
        %1008 = vmin.xlane.f32.xlu0 %v1007
        %v1009 = vpop.xlane.xlu0 %1008
        %v1010 = vcvt.f32.s32 %v1009
        %v1011 = vcvt.f32.s32 %v1005
        %v1012 = vshll.u32 %v1011, 16
        %v1013 = vadd.s32 %v1012, %v1010
        %v1014 = vsel %vm888, %v936, 2147483647
        %v1015 = vand.u32 %v1014, 65535
        %v1016 = vshra.s32 %v1014, 16
        %v1017 = vcvt.s32.f32 %v1015
        %v1018 = vcvt.s32.f32 %v1016
        %1019 = vmin.xlane.f32.xlu0 %v1018
        %v1020 = vpop.xlane.xlu0 %1019
        %vm1021 = vcmp.eq.f32.partialorder %v1018, %v1020
        %v1022 = vsel %vm1021, %v1017, inf
        %1023 = vmin.xlane.f32.xlu0 %v1022
        %v1024 = vpop.xlane.xlu0 %1023
        %v1025 = vcvt.f32.s32 %v1024
        %v1026 = vcvt.f32.s32 %v1020
        %v1027 = vshll.u32 %v1026, 16
        %v1028 = vadd.s32 %v1027, %v1025
        %v1029 = vsel %vm888, %v937, 2147483647
        %v1030 = vand.u32 %v1029, 65535
        %v1031 = vshra.s32 %v1029, 16
        %v1032 = vcvt.s32.f32 %v1030
        %v1033 = vcvt.s32.f32 %v1031
        %1034 = vmin.xlane.f32.xlu0 %v1033
        %v1035 = vpop.xlane.xlu0 %1034
        %vm1036 = vcmp.eq.f32.partialorder %v1033, %v1035
        %v1037 = vsel %vm1036, %v1032, inf
        %1038 = vmin.xlane.f32.xlu0 %v1037
        %v1039 = vpop.xlane.xlu0 %1038
        %v1040 = vcvt.f32.s32 %v1039
        %v1041 = vcvt.f32.s32 %v1035
        %v1042 = vshll.u32 %v1041, 16
        %v1043 = vadd.s32 %v1042, %v1040
        %v1044 = vsel %vm888, %v938, 2147483647
        %v1045 = vand.u32 %v1044, 65535
        %v1046 = vshra.s32 %v1044, 16
        %v1047 = vcvt.s32.f32 %v1045
        %v1048 = vcvt.s32.f32 %v1046
        %1049 = vmin.xlane.f32.xlu0 %v1048
        %v1050 = vpop.xlane.xlu0 %1049
        %vm1051 = vcmp.eq.f32.partialorder %v1048, %v1050
        %v1052 = vsel %vm1051, %v1047, inf
        %1053 = vmin.xlane.f32.xlu0 %v1052
        %v1054 = vpop.xlane.xlu0 %1053
        %v1055 = vcvt.f32.s32 %v1054
        %v1056 = vcvt.f32.s32 %v1050
        %v1057 = vshll.u32 %v1056, 16
        %v1058 = vadd.s32 %v1057, %v1055
        %vm1059 = vcmp.eq.s32.totalorder %v457, %v953
        %vm1060 = vcmp.eq.s32.totalorder %v457, %v968
        %vm1061 = vcmp.eq.s32.totalorder %v457, %v983
        %vm1062 = vcmp.eq.s32.totalorder %v457, %v998
        %vm1063 = vcmp.eq.s32.totalorder %v457, %v1013
        %vm1064 = vcmp.eq.s32.totalorder %v457, %v1028
        %vm1065 = vcmp.eq.s32.totalorder %v457, %v1043
        %vm1066 = vcmp.eq.s32.totalorder %v457, %v1058
        %1075 = vrot.lane.b32.xlu0 %v353, 64
        %v1076 = vpop.permute.xlu0 %1075
        %1077 = vrot.lane.b32.xlu0 %v357, 64
        %v1078 = vpop.permute.xlu0 %1077
        %1079 = vrot.lane.b32.xlu0 %v363, 64
        %v1080 = vpop.permute.xlu0 %1079
        %1081 = vrot.lane.b32.xlu0 %v367, 64
        %v1082 = vpop.permute.xlu0 %1081
        %1083 = vrot.lane.b32.xlu0 %v373, 64
        %v1084 = vpop.permute.xlu0 %1083
        %1085 = vrot.lane.b32.xlu0 %v377, 64
        %v1086 = vpop.permute.xlu0 %1085
        %1087 = vrot.lane.b32.xlu0 %v383, 64
        %v1088 = vpop.permute.xlu0 %1087
        %1089 = vrot.lane.b32.xlu0 %v387, 64
        %v1090 = vpop.permute.xlu0 %1089
        %v1099 = vsel %vm1059, -inf, %v1076
        %v1100 = vsel %vm1060, -inf, %v1078
        %v1101 = vsel %vm1061, -inf, %v1080
        %v1102 = vsel %vm1062, -inf, %v1082
        %v1103 = vsel %vm1063, -inf, %v1084
        %v1104 = vsel %vm1064, -inf, %v1086
        %v1105 = vsel %vm1065, -inf, %v1088
        %v1106 = vsel %vm1066, -inf, %v1090
        %v1107 = vsel %vm458, %v1099, -inf
        %1108 = vmax.xlane.f32.xlu0 %v1107
        %v1109 = vpop.xlane.xlu0 %1108
        %v1110 = vsel %vm458, %v1100, -inf
        %1111 = vmax.xlane.f32.xlu0 %v1110
        %v1112 = vpop.xlane.xlu0 %1111
        %v1113 = vsel %vm458, %v1101, -inf
        %1114 = vmax.xlane.f32.xlu0 %v1113
        %v1115 = vpop.xlane.xlu0 %1114
        %v1116 = vsel %vm458, %v1102, -inf
        %1117 = vmax.xlane.f32.xlu0 %v1116
        %v1118 = vpop.xlane.xlu0 %1117
        %v1119 = vsel %vm458, %v1103, -inf
        %1120 = vmax.xlane.f32.xlu0 %v1119
        %v1121 = vpop.xlane.xlu0 %1120
        %v1122 = vsel %vm458, %v1104, -inf
        %1123 = vmax.xlane.f32.xlu0 %v1122
        %v1124 = vpop.xlane.xlu0 %1123
        %v1125 = vsel %vm458, %v1105, -inf
        %1126 = vmax.xlane.f32.xlu0 %v1125
        %v1127 = vpop.xlane.xlu0 %1126
        %v1128 = vsel %vm458, %v1106, -inf
        %1129 = vmax.xlane.f32.xlu0 %v1128
        %v1130 = vpop.xlane.xlu0 %1129
        %v1131 = vadd.f32 %v913, %v1109
        %v1132 = vadd.f32 %v914, %v1112
        %v1133 = vadd.f32 %v915, %v1115
        %v1134 = vadd.f32 %v916, %v1118
        %v1135 = vadd.f32 %v917, %v1121
        %v1136 = vadd.f32 %v918, %v1124
        %v1137 = vadd.f32 %v919, %v1127
        %v1138 = vadd.f32 %v920, %v1130
        %vm1139 = vcmp.eq.f32.partialorder %v1099, %v1109
        %vm1140 = vcmp.eq.f32.partialorder %v1100, %v1112
        %vm1141 = vcmp.eq.f32.partialorder %v1101, %v1115
        %vm1142 = vcmp.eq.f32.partialorder %v1102, %v1118
        %vm1143 = vcmp.eq.f32.partialorder %v1103, %v1121
        %vm1144 = vcmp.eq.f32.partialorder %v1104, %v1124
        %vm1145 = vcmp.eq.f32.partialorder %v1105, %v1127
        %vm1146 = vcmp.eq.f32.partialorder %v1106, %v1130
        %v1147 = vsel %vm1139, %v457, 64
        %v1148 = vsel %vm1140, %v457, 64
        %v1149 = vsel %vm1141, %v457, 64
        %v1150 = vsel %vm1142, %v457, 64
        %v1151 = vsel %vm1143, %v457, 64
        %v1152 = vsel %vm1144, %v457, 64
        %v1153 = vsel %vm1145, %v457, 64
        %v1154 = vsel %vm1146, %v457, 64
        %v1155 = vsel %vm458, %v1147, 2147483647
        %v1156 = vand.u32 %v1155, 65535
        %v1157 = vshra.s32 %v1155, 16
        %v1158 = vcvt.s32.f32 %v1156
        %v1159 = vcvt.s32.f32 %v1157
        %1160 = vmin.xlane.f32.xlu0 %v1159
        %v1161 = vpop.xlane.xlu0 %1160
        %vm1162 = vcmp.eq.f32.partialorder %v1159, %v1161
        %v1163 = vsel %vm1162, %v1158, inf
        %1164 = vmin.xlane.f32.xlu0 %v1163
        %v1165 = vpop.xlane.xlu0 %1164
        %v1166 = vcvt.f32.s32 %v1165
        %v1167 = vcvt.f32.s32 %v1161
        %v1168 = vshll.u32 %v1167, 16
        %v1169 = vadd.s32 %v1168, %v1166
        %v1170 = vsel %vm458, %v1148, 2147483647
        %v1171 = vand.u32 %v1170, 65535
        %v1172 = vshra.s32 %v1170, 16
        %v1173 = vcvt.s32.f32 %v1171
        %v1174 = vcvt.s32.f32 %v1172
        %1175 = vmin.xlane.f32.xlu0 %v1174
        %v1176 = vpop.xlane.xlu0 %1175
        %vm1177 = vcmp.eq.f32.partialorder %v1174, %v1176
        %v1178 = vsel %vm1177, %v1173, inf
        %1179 = vmin.xlane.f32.xlu0 %v1178
        %v1180 = vpop.xlane.xlu0 %1179
        %v1181 = vcvt.f32.s32 %v1180
        %v1182 = vcvt.f32.s32 %v1176
        %v1183 = vshll.u32 %v1182, 16
        %v1184 = vadd.s32 %v1183, %v1181
        %v1185 = vsel %vm458, %v1149, 2147483647
        %v1186 = vand.u32 %v1185, 65535
        %v1187 = vshra.s32 %v1185, 16
        %v1188 = vcvt.s32.f32 %v1186
        %v1189 = vcvt.s32.f32 %v1187
        %1190 = vmin.xlane.f32.xlu0 %v1189
        %v1191 = vpop.xlane.xlu0 %1190
        %vm1192 = vcmp.eq.f32.partialorder %v1189, %v1191
        %v1193 = vsel %vm1192, %v1188, inf
        %1194 = vmin.xlane.f32.xlu0 %v1193
        %v1195 = vpop.xlane.xlu0 %1194
        %v1196 = vcvt.f32.s32 %v1195
        %v1197 = vcvt.f32.s32 %v1191
        %v1198 = vshll.u32 %v1197, 16
        %v1199 = vadd.s32 %v1198, %v1196
        %v1200 = vsel %vm458, %v1150, 2147483647
        %v1201 = vand.u32 %v1200, 65535
        %v1202 = vshra.s32 %v1200, 16
        %v1203 = vcvt.s32.f32 %v1201
        %v1204 = vcvt.s32.f32 %v1202
        %1205 = vmin.xlane.f32.xlu0 %v1204
        %v1206 = vpop.xlane.xlu0 %1205
        %vm1207 = vcmp.eq.f32.partialorder %v1204, %v1206
        %v1208 = vsel %vm1207, %v1203, inf
        %1209 = vmin.xlane.f32.xlu0 %v1208
        %v1210 = vpop.xlane.xlu0 %1209
        %v1211 = vcvt.f32.s32 %v1210
        %v1212 = vcvt.f32.s32 %v1206
        %v1213 = vshll.u32 %v1212, 16
        %v1214 = vadd.s32 %v1213, %v1211
        %v1215 = vsel %vm458, %v1151, 2147483647
        %v1216 = vand.u32 %v1215, 65535
        %v1217 = vshra.s32 %v1215, 16
        %v1218 = vcvt.s32.f32 %v1216
        %v1219 = vcvt.s32.f32 %v1217
        %1220 = vmin.xlane.f32.xlu0 %v1219
        %v1221 = vpop.xlane.xlu0 %1220
        %vm1222 = vcmp.eq.f32.partialorder %v1219, %v1221
        %v1223 = vsel %vm1222, %v1218, inf
        %1224 = vmin.xlane.f32.xlu0 %v1223
        %v1225 = vpop.xlane.xlu0 %1224
        %v1226 = vcvt.f32.s32 %v1225
        %v1227 = vcvt.f32.s32 %v1221
        %v1228 = vshll.u32 %v1227, 16
        %v1229 = vadd.s32 %v1228, %v1226
        %v1230 = vsel %vm458, %v1152, 2147483647
        %v1231 = vand.u32 %v1230, 65535
        %v1232 = vshra.s32 %v1230, 16
        %v1233 = vcvt.s32.f32 %v1231
        %v1234 = vcvt.s32.f32 %v1232
        %1235 = vmin.xlane.f32.xlu0 %v1234
        %v1236 = vpop.xlane.xlu0 %1235
        %vm1237 = vcmp.eq.f32.partialorder %v1234, %v1236
        %v1238 = vsel %vm1237, %v1233, inf
        %1239 = vmin.xlane.f32.xlu0 %v1238
        %v1240 = vpop.xlane.xlu0 %1239
        %v1241 = vcvt.f32.s32 %v1240
        %v1242 = vcvt.f32.s32 %v1236
        %v1243 = vshll.u32 %v1242, 16
        %v1244 = vadd.s32 %v1243, %v1241
        %v1245 = vsel %vm458, %v1153, 2147483647
        %v1246 = vand.u32 %v1245, 65535
        %v1247 = vshra.s32 %v1245, 16
        %v1248 = vcvt.s32.f32 %v1246
        %v1249 = vcvt.s32.f32 %v1247
        %1250 = vmin.xlane.f32.xlu0 %v1249
        %v1251 = vpop.xlane.xlu0 %1250
        %vm1252 = vcmp.eq.f32.partialorder %v1249, %v1251
        %v1253 = vsel %vm1252, %v1248, inf
        %1254 = vmin.xlane.f32.xlu0 %v1253
        %v1255 = vpop.xlane.xlu0 %1254
        %v1256 = vcvt.f32.s32 %v1255
        %v1257 = vcvt.f32.s32 %v1251
        %v1258 = vshll.u32 %v1257, 16
        %v1259 = vadd.s32 %v1258, %v1256
        %v1260 = vsel %vm458, %v1154, 2147483647
        %v1261 = vand.u32 %v1260, 65535
        %v1262 = vshra.s32 %v1260, 16
        %v1263 = vcvt.s32.f32 %v1261
        %v1264 = vcvt.s32.f32 %v1262
        %1265 = vmin.xlane.f32.xlu0 %v1264
        %v1266 = vpop.xlane.xlu0 %1265
        %vm1267 = vcmp.eq.f32.partialorder %v1264, %v1266
        %v1268 = vsel %vm1267, %v1263, inf
        %1269 = vmin.xlane.f32.xlu0 %v1268
        %v1270 = vpop.xlane.xlu0 %1269
        %v1271 = vcvt.f32.s32 %v1270
        %v1272 = vcvt.f32.s32 %v1266
        %v1273 = vshll.u32 %v1272, 16
        %v1274 = vadd.s32 %v1273, %v1271
        %vm1275 = vcmp.eq.s32.totalorder %v457, %v1169
        %vm1276 = vcmp.eq.s32.totalorder %v457, %v1184
        %vm1277 = vcmp.eq.s32.totalorder %v457, %v1199
        %vm1278 = vcmp.eq.s32.totalorder %v457, %v1214
        %vm1279 = vcmp.eq.s32.totalorder %v457, %v1229
        %vm1280 = vcmp.eq.s32.totalorder %v457, %v1244
        %vm1281 = vcmp.eq.s32.totalorder %v457, %v1259
        %vm1282 = vcmp.eq.s32.totalorder %v457, %v1274
        %v1283 = vsel %vm1275, -inf, %v1099
        %v1284 = vsel %vm1276, -inf, %v1100
        %v1285 = vsel %vm1277, -inf, %v1101
        %v1286 = vsel %vm1278, -inf, %v1102
        %v1287 = vsel %vm1279, -inf, %v1103
        %v1288 = vsel %vm1280, -inf, %v1104
        %v1289 = vsel %vm1281, -inf, %v1105
        %v1290 = vsel %vm1282, -inf, %v1106
        %v1291 = vsel %vm458, %v1283, -inf
        %1292 = vmax.xlane.f32.xlu0 %v1291
        %v1293 = vpop.xlane.xlu0 %1292
        %v1294 = vsel %vm458, %v1284, -inf
        %1295 = vmax.xlane.f32.xlu0 %v1294
        %v1296 = vpop.xlane.xlu0 %1295
        %v1297 = vsel %vm458, %v1285, -inf
        %1298 = vmax.xlane.f32.xlu0 %v1297
        %v1299 = vpop.xlane.xlu0 %1298
        %v1300 = vsel %vm458, %v1286, -inf
        %1301 = vmax.xlane.f32.xlu0 %v1300
        %v1302 = vpop.xlane.xlu0 %1301
        %v1303 = vsel %vm458, %v1287, -inf
        %1304 = vmax.xlane.f32.xlu0 %v1303
        %v1305 = vpop.xlane.xlu0 %1304
        %v1306 = vsel %vm458, %v1288, -inf
        %1307 = vmax.xlane.f32.xlu0 %v1306
        %v1308 = vpop.xlane.xlu0 %1307
        %v1309 = vsel %vm458, %v1289, -inf
        %1310 = vmax.xlane.f32.xlu0 %v1309
        %v1311 = vpop.xlane.xlu0 %1310
        %v1312 = vsel %vm458, %v1290, -inf
        %1313 = vmax.xlane.f32.xlu0 %v1312
        %v1314 = vpop.xlane.xlu0 %1313
        %v1315 = vadd.f32 %v1131, %v1293
        %v1316 = vadd.f32 %v1132, %v1296
        %v1317 = vadd.f32 %v1133, %v1299
        %v1318 = vadd.f32 %v1134, %v1302
        %v1319 = vadd.f32 %v1135, %v1305
        %v1320 = vadd.f32 %v1136, %v1308
        %v1321 = vadd.f32 %v1137, %v1311
        %v1322 = vadd.f32 %v1138, %v1314
        %v1323 = vsel %vm859, %v1315, 0.0
        %v1324 = vsel %vm859, %v1316, 0.0
        %v1325 = vadd.f32 %v1323, %v1324
        %v1326 = vsel %vm859, %v1317, 0.0
        %v1327 = vadd.f32 %v1325, %v1326
        %v1328 = vsel %vm859, %v1318, 0.0
        %v1329 = vadd.f32 %v1327, %v1328
        %v1330 = vsel %vm859, %v1319, 0.0
        %v1331 = vadd.f32 %v1329, %v1330
        %v1332 = vsel %vm859, %v1320, 0.0
        %v1333 = vadd.f32 %v1331, %v1332
        %v1334 = vsel %vm859, %v1321, 0.0
        %v1335 = vadd.f32 %v1333, %v1334
        %v1336 = vsel %vm859, %v1322, 0.0
        %v1337 = vadd.f32 %v1335, %v1336
        %1338 = vadd.xlane.f32.xlu0 %v1337
        %v1339 = vpop.xlane.xlu0 %1338
        %v1340 = vrot.slane %v1339, 4
        %v1341 = vadd.f32 %v1339, %v1340
        %v1342 = vrot.slane %v1341, 2
        %v1343 = vadd.f32 %v1341, %v1342
        %v1344 = vrot.slane %v1343, 1
        %v1345 = vadd.f32 %v1343, %v1344
        %s1346 = vtos %v1345
        %vm1347 = vcmp.eq.s32.totalorder %v457, 1
        %v1348 = vstv %s1346
        %v1349 = vsel %vm1347, %v1348, 0.0
        %v1350 = vadd.f32 %v887, %v1349
        %v1351 = vsel %vm458, %v355, -inf
        %1352 = vmax.xlane.f32.xlu0 %v1351
        %v1353 = vpop.xlane.xlu0 %1352
        %v1354 = vsel %vm458, %v359, -inf
        %1355 = vmax.xlane.f32.xlu0 %v1354
        %v1356 = vpop.xlane.xlu0 %1355
        %v1357 = vsel %vm458, %v365, -inf
        %1358 = vmax.xlane.f32.xlu0 %v1357
        %v1359 = vpop.xlane.xlu0 %1358
        %v1360 = vsel %vm458, %v369, -inf
        %1361 = vmax.xlane.f32.xlu0 %v1360
        %v1362 = vpop.xlane.xlu0 %1361
        %v1363 = vsel %vm458, %v375, -inf
        %1364 = vmax.xlane.f32.xlu0 %v1363
        %v1365 = vpop.xlane.xlu0 %1364
        %v1366 = vsel %vm458, %v379, -inf
        %1367 = vmax.xlane.f32.xlu0 %v1366
        %v1368 = vpop.xlane.xlu0 %1367
        %v1369 = vsel %vm458, %v385, -inf
        %1370 = vmax.xlane.f32.xlu0 %v1369
        %v1371 = vpop.xlane.xlu0 %1370
        %v1372 = vsel %vm458, %v389, -inf
        %1373 = vmax.xlane.f32.xlu0 %v1372
        %v1374 = vpop.xlane.xlu0 %1373
        %v1375 = vadd.f32 %v1353, 0.0
        %v1376 = vadd.f32 %v1356, 0.0
        %v1377 = vadd.f32 %v1359, 0.0
        %v1378 = vadd.f32 %v1362, 0.0
        %v1379 = vadd.f32 %v1365, 0.0
        %v1380 = vadd.f32 %v1368, 0.0
        %v1381 = vadd.f32 %v1371, 0.0
        %v1382 = vadd.f32 %v1374, 0.0
        %vm1383 = vcmp.eq.f32.partialorder %v355, %v1353
        %vm1384 = vcmp.eq.f32.partialorder %v359, %v1356
        %vm1385 = vcmp.eq.f32.partialorder %v365, %v1359
        %vm1386 = vcmp.eq.f32.partialorder %v369, %v1362
        %vm1387 = vcmp.eq.f32.partialorder %v375, %v1365
        %vm1388 = vcmp.eq.f32.partialorder %v379, %v1368
        %vm1389 = vcmp.eq.f32.partialorder %v385, %v1371
        %vm1390 = vcmp.eq.f32.partialorder %v389, %v1374
        %v1391 = vsel %vm1383, %v457, 64
        %v1392 = vsel %vm1384, %v457, 64
        %v1393 = vsel %vm1385, %v457, 64
        %v1394 = vsel %vm1386, %v457, 64
        %v1395 = vsel %vm1387, %v457, 64
        %v1396 = vsel %vm1388, %v457, 64
        %v1397 = vsel %vm1389, %v457, 64
        %v1398 = vsel %vm1390, %v457, 64
        %v1399 = vsel %vm458, %v1391, 2147483647
        %v1400 = vand.u32 %v1399, 65535
        %v1401 = vshra.s32 %v1399, 16
        %v1402 = vcvt.s32.f32 %v1400
        %v1403 = vcvt.s32.f32 %v1401
        %1404 = vmin.xlane.f32.xlu0 %v1403
        %v1405 = vpop.xlane.xlu0 %1404
        %vm1406 = vcmp.eq.f32.partialorder %v1403, %v1405
        %v1407 = vsel %vm1406, %v1402, inf
        %1408 = vmin.xlane.f32.xlu0 %v1407
        %v1409 = vpop.xlane.xlu0 %1408
        %v1410 = vcvt.f32.s32 %v1409
        %v1411 = vcvt.f32.s32 %v1405
        %v1412 = vshll.u32 %v1411, 16
        %v1413 = vadd.s32 %v1412, %v1410
        %v1414 = vsel %vm458, %v1392, 2147483647
        %v1415 = vand.u32 %v1414, 65535
        %v1416 = vshra.s32 %v1414, 16
        %v1417 = vcvt.s32.f32 %v1415
        %v1418 = vcvt.s32.f32 %v1416
        %1419 = vmin.xlane.f32.xlu0 %v1418
        %v1420 = vpop.xlane.xlu0 %1419
        %vm1421 = vcmp.eq.f32.partialorder %v1418, %v1420
        %v1422 = vsel %vm1421, %v1417, inf
        %1423 = vmin.xlane.f32.xlu0 %v1422
        %v1424 = vpop.xlane.xlu0 %1423
        %v1425 = vcvt.f32.s32 %v1424
        %v1426 = vcvt.f32.s32 %v1420
        %v1427 = vshll.u32 %v1426, 16
        %v1428 = vadd.s32 %v1427, %v1425
        %v1429 = vsel %vm458, %v1393, 2147483647
        %v1430 = vand.u32 %v1429, 65535
        %v1431 = vshra.s32 %v1429, 16
        %v1432 = vcvt.s32.f32 %v1430
        %v1433 = vcvt.s32.f32 %v1431
        %1434 = vmin.xlane.f32.xlu0 %v1433
        %v1435 = vpop.xlane.xlu0 %1434
        %vm1436 = vcmp.eq.f32.partialorder %v1433, %v1435
        %v1437 = vsel %vm1436, %v1432, inf
        %1438 = vmin.xlane.f32.xlu0 %v1437
        %v1439 = vpop.xlane.xlu0 %1438
        %v1440 = vcvt.f32.s32 %v1439
        %v1441 = vcvt.f32.s32 %v1435
        %v1442 = vshll.u32 %v1441, 16
        %v1443 = vadd.s32 %v1442, %v1440
        %v1444 = vsel %vm458, %v1394, 2147483647
        %v1445 = vand.u32 %v1444, 65535
        %v1446 = vshra.s32 %v1444, 16
        %v1447 = vcvt.s32.f32 %v1445
        %v1448 = vcvt.s32.f32 %v1446
        %1449 = vmin.xlane.f32.xlu0 %v1448
        %v1450 = vpop.xlane.xlu0 %1449
        %vm1451 = vcmp.eq.f32.partialorder %v1448, %v1450
        %v1452 = vsel %vm1451, %v1447, inf
        %1453 = vmin.xlane.f32.xlu0 %v1452
        %v1454 = vpop.xlane.xlu0 %1453
        %v1455 = vcvt.f32.s32 %v1454
        %v1456 = vcvt.f32.s32 %v1450
        %v1457 = vshll.u32 %v1456, 16
        %v1458 = vadd.s32 %v1457, %v1455
        %v1459 = vsel %vm458, %v1395, 2147483647
        %v1460 = vand.u32 %v1459, 65535
        %v1461 = vshra.s32 %v1459, 16
        %v1462 = vcvt.s32.f32 %v1460
        %v1463 = vcvt.s32.f32 %v1461
        %1464 = vmin.xlane.f32.xlu0 %v1463
        %v1465 = vpop.xlane.xlu0 %1464
        %vm1466 = vcmp.eq.f32.partialorder %v1463, %v1465
        %v1467 = vsel %vm1466, %v1462, inf
        %1468 = vmin.xlane.f32.xlu0 %v1467
        %v1469 = vpop.xlane.xlu0 %1468
        %v1470 = vcvt.f32.s32 %v1469
        %v1471 = vcvt.f32.s32 %v1465
        %v1472 = vshll.u32 %v1471, 16
        %v1473 = vadd.s32 %v1472, %v1470
        %v1474 = vsel %vm458, %v1396, 2147483647
        %v1475 = vand.u32 %v1474, 65535
        %v1476 = vshra.s32 %v1474, 16
        %v1477 = vcvt.s32.f32 %v1475
        %v1478 = vcvt.s32.f32 %v1476
        %1479 = vmin.xlane.f32.xlu0 %v1478
        %v1480 = vpop.xlane.xlu0 %1479
        %vm1481 = vcmp.eq.f32.partialorder %v1478, %v1480
        %v1482 = vsel %vm1481, %v1477, inf
        %1483 = vmin.xlane.f32.xlu0 %v1482
        %v1484 = vpop.xlane.xlu0 %1483
        %v1485 = vcvt.f32.s32 %v1484
        %v1486 = vcvt.f32.s32 %v1480
        %v1487 = vshll.u32 %v1486, 16
        %v1488 = vadd.s32 %v1487, %v1485
        %v1489 = vsel %vm458, %v1397, 2147483647
        %v1490 = vand.u32 %v1489, 65535
        %v1491 = vshra.s32 %v1489, 16
        %v1492 = vcvt.s32.f32 %v1490
        %v1493 = vcvt.s32.f32 %v1491
        %1494 = vmin.xlane.f32.xlu0 %v1493
        %v1495 = vpop.xlane.xlu0 %1494
        %vm1496 = vcmp.eq.f32.partialorder %v1493, %v1495
        %v1497 = vsel %vm1496, %v1492, inf
        %1498 = vmin.xlane.f32.xlu0 %v1497
        %v1499 = vpop.xlane.xlu0 %1498
        %v1500 = vcvt.f32.s32 %v1499
        %v1501 = vcvt.f32.s32 %v1495
        %v1502 = vshll.u32 %v1501, 16
        %v1503 = vadd.s32 %v1502, %v1500
        %v1504 = vsel %vm458, %v1398, 2147483647
        %v1505 = vand.u32 %v1504, 65535
        %v1506 = vshra.s32 %v1504, 16
        %v1507 = vcvt.s32.f32 %v1505
        %v1508 = vcvt.s32.f32 %v1506
        %1509 = vmin.xlane.f32.xlu0 %v1508
        %v1510 = vpop.xlane.xlu0 %1509
        %vm1511 = vcmp.eq.f32.partialorder %v1508, %v1510
        %v1512 = vsel %vm1511, %v1507, inf
        %1513 = vmin.xlane.f32.xlu0 %v1512
        %v1514 = vpop.xlane.xlu0 %1513
        %v1515 = vcvt.f32.s32 %v1514
        %v1516 = vcvt.f32.s32 %v1510
        %v1517 = vshll.u32 %v1516, 16
        %v1518 = vadd.s32 %v1517, %v1515
        %vm1519 = vcmp.eq.s32.totalorder %v457, %v1413
        %vm1520 = vcmp.eq.s32.totalorder %v457, %v1428
        %vm1521 = vcmp.eq.s32.totalorder %v457, %v1443
        %vm1522 = vcmp.eq.s32.totalorder %v457, %v1458
        %vm1523 = vcmp.eq.s32.totalorder %v457, %v1473
        %vm1524 = vcmp.eq.s32.totalorder %v457, %v1488
        %vm1525 = vcmp.eq.s32.totalorder %v457, %v1503
        %vm1526 = vcmp.eq.s32.totalorder %v457, %v1518
        %v1527 = vsel %vm1519, -inf, %v355
        %v1528 = vsel %vm1520, -inf, %v359
        %v1529 = vsel %vm1521, -inf, %v365
        %v1530 = vsel %vm1522, -inf, %v369
        %v1531 = vsel %vm1523, -inf, %v375
        %v1532 = vsel %vm1524, -inf, %v379
        %v1533 = vsel %vm1525, -inf, %v385
        %v1534 = vsel %vm1526, -inf, %v389
        %v1535 = vsel %vm458, %v1527, -inf
        %1536 = vmax.xlane.f32.xlu0 %v1535
        %v1537 = vpop.xlane.xlu0 %1536
        %v1538 = vsel %vm458, %v1528, -inf
        %1539 = vmax.xlane.f32.xlu0 %v1538
        %v1540 = vpop.xlane.xlu0 %1539
        %v1541 = vsel %vm458, %v1529, -inf
        %1542 = vmax.xlane.f32.xlu0 %v1541
        %v1543 = vpop.xlane.xlu0 %1542
        %v1544 = vsel %vm458, %v1530, -inf
        %1545 = vmax.xlane.f32.xlu0 %v1544
        %v1546 = vpop.xlane.xlu0 %1545
        %v1547 = vsel %vm458, %v1531, -inf
        %1548 = vmax.xlane.f32.xlu0 %v1547
        %v1549 = vpop.xlane.xlu0 %1548
        %v1550 = vsel %vm458, %v1532, -inf
        %1551 = vmax.xlane.f32.xlu0 %v1550
        %v1552 = vpop.xlane.xlu0 %1551
        %v1553 = vsel %vm458, %v1533, -inf
        %1554 = vmax.xlane.f32.xlu0 %v1553
        %v1555 = vpop.xlane.xlu0 %1554
        %v1556 = vsel %vm458, %v1534, -inf
        %1557 = vmax.xlane.f32.xlu0 %v1556
        %v1558 = vpop.xlane.xlu0 %1557
        %v1559 = vadd.f32 %v1375, %v1537
        %v1560 = vadd.f32 %v1376, %v1540
        %v1561 = vadd.f32 %v1377, %v1543
        %v1562 = vadd.f32 %v1378, %v1546
        %v1563 = vadd.f32 %v1379, %v1549
        %v1564 = vadd.f32 %v1380, %v1552
        %v1565 = vadd.f32 %v1381, %v1555
        %v1566 = vadd.f32 %v1382, %v1558
        %vm1567 = vcmp.eq.f32.partialorder %v1527, %v1537
        %vm1568 = vcmp.eq.f32.partialorder %v1528, %v1540
        %vm1569 = vcmp.eq.f32.partialorder %v1529, %v1543
        %vm1570 = vcmp.eq.f32.partialorder %v1530, %v1546
        %vm1571 = vcmp.eq.f32.partialorder %v1531, %v1549
        %vm1572 = vcmp.eq.f32.partialorder %v1532, %v1552
        %vm1573 = vcmp.eq.f32.partialorder %v1533, %v1555
        %vm1574 = vcmp.eq.f32.partialorder %v1534, %v1558
        %v1575 = vsel %vm1567, %v457, 64
        %v1576 = vsel %vm1568, %v457, 64
        %v1577 = vsel %vm1569, %v457, 64
        %v1578 = vsel %vm1570, %v457, 64
        %v1579 = vsel %vm1571, %v457, 64
        %v1580 = vsel %vm1572, %v457, 64
        %v1581 = vsel %vm1573, %v457, 64
        %v1582 = vsel %vm1574, %v457, 64
        %v1583 = vsel %vm458, %v1575, 2147483647
        %v1584 = vand.u32 %v1583, 65535
        %v1585 = vshra.s32 %v1583, 16
        %v1586 = vcvt.s32.f32 %v1584
        %v1587 = vcvt.s32.f32 %v1585
        %1588 = vmin.xlane.f32.xlu0 %v1587
        %v1589 = vpop.xlane.xlu0 %1588
        %vm1590 = vcmp.eq.f32.partialorder %v1587, %v1589
        %v1591 = vsel %vm1590, %v1586, inf
        %1592 = vmin.xlane.f32.xlu0 %v1591
        %v1593 = vpop.xlane.xlu0 %1592
        %v1594 = vcvt.f32.s32 %v1593
        %v1595 = vcvt.f32.s32 %v1589
        %v1596 = vshll.u32 %v1595, 16
        %v1597 = vadd.s32 %v1596, %v1594
        %v1598 = vsel %vm458, %v1576, 2147483647
        %v1599 = vand.u32 %v1598, 65535
        %v1600 = vshra.s32 %v1598, 16
        %v1601 = vcvt.s32.f32 %v1599
        %v1602 = vcvt.s32.f32 %v1600
        %1603 = vmin.xlane.f32.xlu0 %v1602
        %v1604 = vpop.xlane.xlu0 %1603
        %vm1605 = vcmp.eq.f32.partialorder %v1602, %v1604
        %v1606 = vsel %vm1605, %v1601, inf
        %1607 = vmin.xlane.f32.xlu0 %v1606
        %v1608 = vpop.xlane.xlu0 %1607
        %v1609 = vcvt.f32.s32 %v1608
        %v1610 = vcvt.f32.s32 %v1604
        %v1611 = vshll.u32 %v1610, 16
        %v1612 = vadd.s32 %v1611, %v1609
        %v1613 = vsel %vm458, %v1577, 2147483647
        %v1614 = vand.u32 %v1613, 65535
        %v1615 = vshra.s32 %v1613, 16
        %v1616 = vcvt.s32.f32 %v1614
        %v1617 = vcvt.s32.f32 %v1615
        %1618 = vmin.xlane.f32.xlu0 %v1617
        %v1619 = vpop.xlane.xlu0 %1618
        %vm1620 = vcmp.eq.f32.partialorder %v1617, %v1619
        %v1621 = vsel %vm1620, %v1616, inf
        %1622 = vmin.xlane.f32.xlu0 %v1621
        %v1623 = vpop.xlane.xlu0 %1622
        %v1624 = vcvt.f32.s32 %v1623
        %v1625 = vcvt.f32.s32 %v1619
        %v1626 = vshll.u32 %v1625, 16
        %v1627 = vadd.s32 %v1626, %v1624
        %v1628 = vsel %vm458, %v1578, 2147483647
        %v1629 = vand.u32 %v1628, 65535
        %v1630 = vshra.s32 %v1628, 16
        %v1631 = vcvt.s32.f32 %v1629
        %v1632 = vcvt.s32.f32 %v1630
        %1633 = vmin.xlane.f32.xlu0 %v1632
        %v1634 = vpop.xlane.xlu0 %1633
        %vm1635 = vcmp.eq.f32.partialorder %v1632, %v1634
        %v1636 = vsel %vm1635, %v1631, inf
        %1637 = vmin.xlane.f32.xlu0 %v1636
        %v1638 = vpop.xlane.xlu0 %1637
        %v1639 = vcvt.f32.s32 %v1638
        %v1640 = vcvt.f32.s32 %v1634
        %v1641 = vshll.u32 %v1640, 16
        %v1642 = vadd.s32 %v1641, %v1639
        %v1643 = vsel %vm458, %v1579, 2147483647
        %v1644 = vand.u32 %v1643, 65535
        %v1645 = vshra.s32 %v1643, 16
        %v1646 = vcvt.s32.f32 %v1644
        %v1647 = vcvt.s32.f32 %v1645
        %1648 = vmin.xlane.f32.xlu0 %v1647
        %v1649 = vpop.xlane.xlu0 %1648
        %vm1650 = vcmp.eq.f32.partialorder %v1647, %v1649
        %v1651 = vsel %vm1650, %v1646, inf
        %1652 = vmin.xlane.f32.xlu0 %v1651
        %v1653 = vpop.xlane.xlu0 %1652
        %v1654 = vcvt.f32.s32 %v1653
        %v1655 = vcvt.f32.s32 %v1649
        %v1656 = vshll.u32 %v1655, 16
        %v1657 = vadd.s32 %v1656, %v1654
        %v1658 = vsel %vm458, %v1580, 2147483647
        %v1659 = vand.u32 %v1658, 65535
        %v1660 = vshra.s32 %v1658, 16
        %v1661 = vcvt.s32.f32 %v1659
        %v1662 = vcvt.s32.f32 %v1660
        %1663 = vmin.xlane.f32.xlu0 %v1662
        %v1664 = vpop.xlane.xlu0 %1663
        %vm1665 = vcmp.eq.f32.partialorder %v1662, %v1664
        %v1666 = vsel %vm1665, %v1661, inf
        %1667 = vmin.xlane.f32.xlu0 %v1666
        %v1668 = vpop.xlane.xlu0 %1667
        %v1669 = vcvt.f32.s32 %v1668
        %v1670 = vcvt.f32.s32 %v1664
        %v1671 = vshll.u32 %v1670, 16
        %v1672 = vadd.s32 %v1671, %v1669
        %v1673 = vsel %vm458, %v1581, 2147483647
        %v1674 = vand.u32 %v1673, 65535
        %v1675 = vshra.s32 %v1673, 16
        %v1676 = vcvt.s32.f32 %v1674
        %v1677 = vcvt.s32.f32 %v1675
        %1678 = vmin.xlane.f32.xlu0 %v1677
        %v1679 = vpop.xlane.xlu0 %1678
        %vm1680 = vcmp.eq.f32.partialorder %v1677, %v1679
        %v1681 = vsel %vm1680, %v1676, inf
        %1682 = vmin.xlane.f32.xlu0 %v1681
        %v1683 = vpop.xlane.xlu0 %1682
        %v1684 = vcvt.f32.s32 %v1683
        %v1685 = vcvt.f32.s32 %v1679
        %v1686 = vshll.u32 %v1685, 16
        %v1687 = vadd.s32 %v1686, %v1684
        %v1688 = vsel %vm458, %v1582, 2147483647
        %v1689 = vand.u32 %v1688, 65535
        %v1690 = vshra.s32 %v1688, 16
        %v1691 = vcvt.s32.f32 %v1689
        %v1692 = vcvt.s32.f32 %v1690
        %1693 = vmin.xlane.f32.xlu0 %v1692
        %v1694 = vpop.xlane.xlu0 %1693
        %vm1695 = vcmp.eq.f32.partialorder %v1692, %v1694
        %v1696 = vsel %vm1695, %v1691, inf
        %1697 = vmin.xlane.f32.xlu0 %v1696
        %v1698 = vpop.xlane.xlu0 %1697
        %v1699 = vcvt.f32.s32 %v1698
        %v1700 = vcvt.f32.s32 %v1694
        %v1701 = vshll.u32 %v1700, 16
        %v1702 = vadd.s32 %v1701, %v1699
        %vm1703 = vcmp.eq.s32.totalorder %v457, %v1597
        %vm1704 = vcmp.eq.s32.totalorder %v457, %v1612
        %vm1705 = vcmp.eq.s32.totalorder %v457, %v1627
        %vm1706 = vcmp.eq.s32.totalorder %v457, %v1642
        %vm1707 = vcmp.eq.s32.totalorder %v457, %v1657
        %vm1708 = vcmp.eq.s32.totalorder %v457, %v1672
        %vm1709 = vcmp.eq.s32.totalorder %v457, %v1687
        %vm1710 = vcmp.eq.s32.totalorder %v457, %v1702
        %v1711 = vsel %vm1703, -inf, %v1527
        %v1712 = vsel %vm1704, -inf, %v1528
        %v1713 = vsel %vm1705, -inf, %v1529
        %v1714 = vsel %vm1706, -inf, %v1530
        %v1715 = vsel %vm1707, -inf, %v1531
        %v1716 = vsel %vm1708, -inf, %v1532
        %v1717 = vsel %vm1709, -inf, %v1533
        %v1718 = vsel %vm1710, -inf, %v1534
        %v1719 = vsel %vm458, %v1711, -inf
        %1720 = vmax.xlane.f32.xlu0 %v1719
        %v1721 = vpop.xlane.xlu0 %1720
        %v1722 = vsel %vm458, %v1712, -inf
        %1723 = vmax.xlane.f32.xlu0 %v1722
        %v1724 = vpop.xlane.xlu0 %1723
        %v1725 = vsel %vm458, %v1713, -inf
        %1726 = vmax.xlane.f32.xlu0 %v1725
        %v1727 = vpop.xlane.xlu0 %1726
        %v1728 = vsel %vm458, %v1714, -inf
        %1729 = vmax.xlane.f32.xlu0 %v1728
        %v1730 = vpop.xlane.xlu0 %1729
        %v1731 = vsel %vm458, %v1715, -inf
        %1732 = vmax.xlane.f32.xlu0 %v1731
        %v1733 = vpop.xlane.xlu0 %1732
        %v1734 = vsel %vm458, %v1716, -inf
        %1735 = vmax.xlane.f32.xlu0 %v1734
        %v1736 = vpop.xlane.xlu0 %1735
        %v1737 = vsel %vm458, %v1717, -inf
        %1738 = vmax.xlane.f32.xlu0 %v1737
        %v1739 = vpop.xlane.xlu0 %1738
        %v1740 = vsel %vm458, %v1718, -inf
        %1741 = vmax.xlane.f32.xlu0 %v1740
        %v1742 = vpop.xlane.xlu0 %1741
        %v1743 = vadd.f32 %v1559, %v1721
        %v1744 = vadd.f32 %v1560, %v1724
        %v1745 = vadd.f32 %v1561, %v1727
        %v1746 = vadd.f32 %v1562, %v1730
        %v1747 = vadd.f32 %v1563, %v1733
        %v1748 = vadd.f32 %v1564, %v1736
        %v1749 = vadd.f32 %v1565, %v1739
        %v1750 = vadd.f32 %v1566, %v1742
        %v1751 = vsel %vm859, %v1743, 0.0
        %v1752 = vsel %vm859, %v1744, 0.0
        %v1753 = vadd.f32 %v1751, %v1752
        %v1754 = vsel %vm859, %v1745, 0.0
        %v1755 = vadd.f32 %v1753, %v1754
        %v1756 = vsel %vm859, %v1746, 0.0
        %v1757 = vadd.f32 %v1755, %v1756
        %v1758 = vsel %vm859, %v1747, 0.0
        %v1759 = vadd.f32 %v1757, %v1758
        %v1760 = vsel %vm859, %v1748, 0.0
        %v1761 = vadd.f32 %v1759, %v1760
        %v1762 = vsel %vm859, %v1749, 0.0
        %v1763 = vadd.f32 %v1761, %v1762
        %v1764 = vsel %vm859, %v1750, 0.0
        %v1765 = vadd.f32 %v1763, %v1764
        %1766 = vadd.xlane.f32.xlu0 %v1765
        %v1767 = vpop.xlane.xlu0 %1766
        %v1768 = vrot.slane %v1767, 4
        %v1769 = vadd.f32 %v1767, %v1768
        %v1770 = vrot.slane %v1769, 2
        %v1771 = vadd.f32 %v1769, %v1770
        %v1772 = vrot.slane %v1771, 1
        %v1773 = vadd.f32 %v1771, %v1772
        %s1774 = vtos %v1773
        %vm1775 = vcmp.eq.s32.totalorder %v457, 2
        %v1776 = vstv %s1774
        %v1777 = vsel %vm1775, %v1776, 0.0
        %v1778 = vadd.f32 %v1350, %v1777
        %v1779 = vsel %vm888, %v355, -inf
        %1780 = vmax.xlane.f32.xlu0 %v1779
        %v1781 = vpop.xlane.xlu0 %1780
        %v1782 = vsel %vm888, %v359, -inf
        %1783 = vmax.xlane.f32.xlu0 %v1782
        %v1784 = vpop.xlane.xlu0 %1783
        %v1785 = vsel %vm888, %v365, -inf
        %1786 = vmax.xlane.f32.xlu0 %v1785
        %v1787 = vpop.xlane.xlu0 %1786
        %v1788 = vsel %vm888, %v369, -inf
        %1789 = vmax.xlane.f32.xlu0 %v1788
        %v1790 = vpop.xlane.xlu0 %1789
        %v1791 = vsel %vm888, %v375, -inf
        %1792 = vmax.xlane.f32.xlu0 %v1791
        %v1793 = vpop.xlane.xlu0 %1792
        %v1794 = vsel %vm888, %v379, -inf
        %1795 = vmax.xlane.f32.xlu0 %v1794
        %v1796 = vpop.xlane.xlu0 %1795
        %v1797 = vsel %vm888, %v385, -inf
        %1798 = vmax.xlane.f32.xlu0 %v1797
        %v1799 = vpop.xlane.xlu0 %1798
        %v1800 = vsel %vm888, %v389, -inf
        %1801 = vmax.xlane.f32.xlu0 %v1800
        %v1802 = vpop.xlane.xlu0 %1801
        %v1803 = vadd.f32 %v1781, 0.0
        %v1804 = vadd.f32 %v1784, 0.0
        %v1805 = vadd.f32 %v1787, 0.0
        %v1806 = vadd.f32 %v1790, 0.0
        %v1807 = vadd.f32 %v1793, 0.0
        %v1808 = vadd.f32 %v1796, 0.0
        %v1809 = vadd.f32 %v1799, 0.0
        %v1810 = vadd.f32 %v1802, 0.0
        %vm1811 = vcmp.eq.f32.partialorder %v355, %v1781
        %vm1812 = vcmp.eq.f32.partialorder %v359, %v1784
        %vm1813 = vcmp.eq.f32.partialorder %v365, %v1787
        %vm1814 = vcmp.eq.f32.partialorder %v369, %v1790
        %vm1815 = vcmp.eq.f32.partialorder %v375, %v1793
        %vm1816 = vcmp.eq.f32.partialorder %v379, %v1796
        %vm1817 = vcmp.eq.f32.partialorder %v385, %v1799
        %vm1818 = vcmp.eq.f32.partialorder %v389, %v1802
        %v1819 = vsel %vm1811, %v930, 64
        %v1820 = vsel %vm1812, %v930, 64
        %v1821 = vsel %vm1813, %v930, 64
        %v1822 = vsel %vm1814, %v930, 64
        %v1823 = vsel %vm1815, %v930, 64
        %v1824 = vsel %vm1816, %v930, 64
        %v1825 = vsel %vm1817, %v930, 64
        %v1826 = vsel %vm1818, %v930, 64
        %v1827 = vsel %vm888, %v1819, 2147483647
        %v1828 = vand.u32 %v1827, 65535
        %v1829 = vshra.s32 %v1827, 16
        %v1830 = vcvt.s32.f32 %v1828
        %v1831 = vcvt.s32.f32 %v1829
        %1832 = vmin.xlane.f32.xlu0 %v1831
        %v1833 = vpop.xlane.xlu0 %1832
        %vm1834 = vcmp.eq.f32.partialorder %v1831, %v1833
        %v1835 = vsel %vm1834, %v1830, inf
        %1836 = vmin.xlane.f32.xlu0 %v1835
        %v1837 = vpop.xlane.xlu0 %1836
        %v1838 = vcvt.f32.s32 %v1837
        %v1839 = vcvt.f32.s32 %v1833
        %v1840 = vshll.u32 %v1839, 16
        %v1841 = vadd.s32 %v1840, %v1838
        %v1842 = vsel %vm888, %v1820, 2147483647
        %v1843 = vand.u32 %v1842, 65535
        %v1844 = vshra.s32 %v1842, 16
        %v1845 = vcvt.s32.f32 %v1843
        %v1846 = vcvt.s32.f32 %v1844
        %1847 = vmin.xlane.f32.xlu0 %v1846
        %v1848 = vpop.xlane.xlu0 %1847
        %vm1849 = vcmp.eq.f32.partialorder %v1846, %v1848
        %v1850 = vsel %vm1849, %v1845, inf
        %1851 = vmin.xlane.f32.xlu0 %v1850
        %v1852 = vpop.xlane.xlu0 %1851
        %v1853 = vcvt.f32.s32 %v1852
        %v1854 = vcvt.f32.s32 %v1848
        %v1855 = vshll.u32 %v1854, 16
        %v1856 = vadd.s32 %v1855, %v1853
        %v1857 = vsel %vm888, %v1821, 2147483647
        %v1858 = vand.u32 %v1857, 65535
        %v1859 = vshra.s32 %v1857, 16
        %v1860 = vcvt.s32.f32 %v1858
        %v1861 = vcvt.s32.f32 %v1859
        %1862 = vmin.xlane.f32.xlu0 %v1861
        %v1863 = vpop.xlane.xlu0 %1862
        %vm1864 = vcmp.eq.f32.partialorder %v1861, %v1863
        %v1865 = vsel %vm1864, %v1860, inf
        %1866 = vmin.xlane.f32.xlu0 %v1865
        %v1867 = vpop.xlane.xlu0 %1866
        %v1868 = vcvt.f32.s32 %v1867
        %v1869 = vcvt.f32.s32 %v1863
        %v1870 = vshll.u32 %v1869, 16
        %v1871 = vadd.s32 %v1870, %v1868
        %v1872 = vsel %vm888, %v1822, 2147483647
        %v1873 = vand.u32 %v1872, 65535
        %v1874 = vshra.s32 %v1872, 16
        %v1875 = vcvt.s32.f32 %v1873
        %v1876 = vcvt.s32.f32 %v1874
        %1877 = vmin.xlane.f32.xlu0 %v1876
        %v1878 = vpop.xlane.xlu0 %1877
        %vm1879 = vcmp.eq.f32.partialorder %v1876, %v1878
        %v1880 = vsel %vm1879, %v1875, inf
        %1881 = vmin.xlane.f32.xlu0 %v1880
        %v1882 = vpop.xlane.xlu0 %1881
        %v1883 = vcvt.f32.s32 %v1882
        %v1884 = vcvt.f32.s32 %v1878
        %v1885 = vshll.u32 %v1884, 16
        %v1886 = vadd.s32 %v1885, %v1883
        %v1887 = vsel %vm888, %v1823, 2147483647
        %v1888 = vand.u32 %v1887, 65535
        %v1889 = vshra.s32 %v1887, 16
        %v1890 = vcvt.s32.f32 %v1888
        %v1891 = vcvt.s32.f32 %v1889
        %1892 = vmin.xlane.f32.xlu0 %v1891
        %v1893 = vpop.xlane.xlu0 %1892
        %vm1894 = vcmp.eq.f32.partialorder %v1891, %v1893
        %v1895 = vsel %vm1894, %v1890, inf
        %1896 = vmin.xlane.f32.xlu0 %v1895
        %v1897 = vpop.xlane.xlu0 %1896
        %v1898 = vcvt.f32.s32 %v1897
        %v1899 = vcvt.f32.s32 %v1893
        %v1900 = vshll.u32 %v1899, 16
        %v1901 = vadd.s32 %v1900, %v1898
        %v1902 = vsel %vm888, %v1824, 2147483647
        %v1903 = vand.u32 %v1902, 65535
        %v1904 = vshra.s32 %v1902, 16
        %v1905 = vcvt.s32.f32 %v1903
        %v1906 = vcvt.s32.f32 %v1904
        %1907 = vmin.xlane.f32.xlu0 %v1906
        %v1908 = vpop.xlane.xlu0 %1907
        %vm1909 = vcmp.eq.f32.partialorder %v1906, %v1908
        %v1910 = vsel %vm1909, %v1905, inf
        %1911 = vmin.xlane.f32.xlu0 %v1910
        %v1912 = vpop.xlane.xlu0 %1911
        %v1913 = vcvt.f32.s32 %v1912
        %v1914 = vcvt.f32.s32 %v1908
        %v1915 = vshll.u32 %v1914, 16
        %v1916 = vadd.s32 %v1915, %v1913
        %v1917 = vsel %vm888, %v1825, 2147483647
        %v1918 = vand.u32 %v1917, 65535
        %v1919 = vshra.s32 %v1917, 16
        %v1920 = vcvt.s32.f32 %v1918
        %v1921 = vcvt.s32.f32 %v1919
        %1922 = vmin.xlane.f32.xlu0 %v1921
        %v1923 = vpop.xlane.xlu0 %1922
        %vm1924 = vcmp.eq.f32.partialorder %v1921, %v1923
        %v1925 = vsel %vm1924, %v1920, inf
        %1926 = vmin.xlane.f32.xlu0 %v1925
        %v1927 = vpop.xlane.xlu0 %1926
        %v1928 = vcvt.f32.s32 %v1927
        %v1929 = vcvt.f32.s32 %v1923
        %v1930 = vshll.u32 %v1929, 16
        %v1931 = vadd.s32 %v1930, %v1928
        %v1932 = vsel %vm888, %v1826, 2147483647
        %v1933 = vand.u32 %v1932, 65535
        %v1934 = vshra.s32 %v1932, 16
        %v1935 = vcvt.s32.f32 %v1933
        %v1936 = vcvt.s32.f32 %v1934
        %1937 = vmin.xlane.f32.xlu0 %v1936
        %v1938 = vpop.xlane.xlu0 %1937
        %vm1939 = vcmp.eq.f32.partialorder %v1936, %v1938
        %v1940 = vsel %vm1939, %v1935, inf
        %1941 = vmin.xlane.f32.xlu0 %v1940
        %v1942 = vpop.xlane.xlu0 %1941
        %v1943 = vcvt.f32.s32 %v1942
        %v1944 = vcvt.f32.s32 %v1938
        %v1945 = vshll.u32 %v1944, 16
        %v1946 = vadd.s32 %v1945, %v1943
        %vm1947 = vcmp.eq.s32.totalorder %v457, %v1841
        %vm1948 = vcmp.eq.s32.totalorder %v457, %v1856
        %vm1949 = vcmp.eq.s32.totalorder %v457, %v1871
        %vm1950 = vcmp.eq.s32.totalorder %v457, %v1886
        %vm1951 = vcmp.eq.s32.totalorder %v457, %v1901
        %vm1952 = vcmp.eq.s32.totalorder %v457, %v1916
        %vm1953 = vcmp.eq.s32.totalorder %v457, %v1931
        %vm1954 = vcmp.eq.s32.totalorder %v457, %v1946
        %1963 = vrot.lane.b32.xlu0 %v355, 64
        %v1964 = vpop.permute.xlu0 %1963
        %1965 = vrot.lane.b32.xlu0 %v359, 64
        %v1966 = vpop.permute.xlu0 %1965
        %1967 = vrot.lane.b32.xlu0 %v365, 64
        %v1968 = vpop.permute.xlu0 %1967
        %1969 = vrot.lane.b32.xlu0 %v369, 64
        %v1970 = vpop.permute.xlu0 %1969
        %1971 = vrot.lane.b32.xlu0 %v375, 64
        %v1972 = vpop.permute.xlu0 %1971
        %1973 = vrot.lane.b32.xlu0 %v379, 64
        %v1974 = vpop.permute.xlu0 %1973
        %1975 = vrot.lane.b32.xlu0 %v385, 64
        %v1976 = vpop.permute.xlu0 %1975
        %1977 = vrot.lane.b32.xlu0 %v389, 64
        %v1978 = vpop.permute.xlu0 %1977
        %v1987 = vsel %vm1947, -inf, %v1964
        %v1988 = vsel %vm1948, -inf, %v1966
        %v1989 = vsel %vm1949, -inf, %v1968
        %v1990 = vsel %vm1950, -inf, %v1970
        %v1991 = vsel %vm1951, -inf, %v1972
        %v1992 = vsel %vm1952, -inf, %v1974
        %v1993 = vsel %vm1953, -inf, %v1976
        %v1994 = vsel %vm1954, -inf, %v1978
        %v1995 = vsel %vm458, %v1987, -inf
        %1996 = vmax.xlane.f32.xlu0 %v1995
        %v1997 = vpop.xlane.xlu0 %1996
        %v1998 = vsel %vm458, %v1988, -inf
        %1999 = vmax.xlane.f32.xlu0 %v1998
        %v2000 = vpop.xlane.xlu0 %1999
        %v2001 = vsel %vm458, %v1989, -inf
        %2002 = vmax.xlane.f32.xlu0 %v2001
        %v2003 = vpop.xlane.xlu0 %2002
        %v2004 = vsel %vm458, %v1990, -inf
        %2005 = vmax.xlane.f32.xlu0 %v2004
        %v2006 = vpop.xlane.xlu0 %2005
        %v2007 = vsel %vm458, %v1991, -inf
        %2008 = vmax.xlane.f32.xlu0 %v2007
        %v2009 = vpop.xlane.xlu0 %2008
        %v2010 = vsel %vm458, %v1992, -inf
        %2011 = vmax.xlane.f32.xlu0 %v2010
        %v2012 = vpop.xlane.xlu0 %2011
        %v2013 = vsel %vm458, %v1993, -inf
        %2014 = vmax.xlane.f32.xlu0 %v2013
        %v2015 = vpop.xlane.xlu0 %2014
        %v2016 = vsel %vm458, %v1994, -inf
        %2017 = vmax.xlane.f32.xlu0 %v2016
        %v2018 = vpop.xlane.xlu0 %2017
        %v2019 = vadd.f32 %v1803, %v1997
        %v2020 = vadd.f32 %v1804, %v2000
        %v2021 = vadd.f32 %v1805, %v2003
        %v2022 = vadd.f32 %v1806, %v2006
        %v2023 = vadd.f32 %v1807, %v2009
        %v2024 = vadd.f32 %v1808, %v2012
        %v2025 = vadd.f32 %v1809, %v2015
        %v2026 = vadd.f32 %v1810, %v2018
        %vm2027 = vcmp.eq.f32.partialorder %v1987, %v1997
        %vm2028 = vcmp.eq.f32.partialorder %v1988, %v2000
        %vm2029 = vcmp.eq.f32.partialorder %v1989, %v2003
        %vm2030 = vcmp.eq.f32.partialorder %v1990, %v2006
        %vm2031 = vcmp.eq.f32.partialorder %v1991, %v2009
        %vm2032 = vcmp.eq.f32.partialorder %v1992, %v2012
        %vm2033 = vcmp.eq.f32.partialorder %v1993, %v2015
        %vm2034 = vcmp.eq.f32.partialorder %v1994, %v2018
        %v2035 = vsel %vm2027, %v457, 64
        %v2036 = vsel %vm2028, %v457, 64
        %v2037 = vsel %vm2029, %v457, 64
        %v2038 = vsel %vm2030, %v457, 64
        %v2039 = vsel %vm2031, %v457, 64
        %v2040 = vsel %vm2032, %v457, 64
        %v2041 = vsel %vm2033, %v457, 64
        %v2042 = vsel %vm2034, %v457, 64
        %v2043 = vsel %vm458, %v2035, 2147483647
        %v2044 = vand.u32 %v2043, 65535
        %v2045 = vshra.s32 %v2043, 16
        %v2046 = vcvt.s32.f32 %v2044
        %v2047 = vcvt.s32.f32 %v2045
        %2048 = vmin.xlane.f32.xlu0 %v2047
        %v2049 = vpop.xlane.xlu0 %2048
        %vm2050 = vcmp.eq.f32.partialorder %v2047, %v2049
        %v2051 = vsel %vm2050, %v2046, inf
        %2052 = vmin.xlane.f32.xlu0 %v2051
        %v2053 = vpop.xlane.xlu0 %2052
        %v2054 = vcvt.f32.s32 %v2053
        %v2055 = vcvt.f32.s32 %v2049
        %v2056 = vshll.u32 %v2055, 16
        %v2057 = vadd.s32 %v2056, %v2054
        %v2058 = vsel %vm458, %v2036, 2147483647
        %v2059 = vand.u32 %v2058, 65535
        %v2060 = vshra.s32 %v2058, 16
        %v2061 = vcvt.s32.f32 %v2059
        %v2062 = vcvt.s32.f32 %v2060
        %2063 = vmin.xlane.f32.xlu0 %v2062
        %v2064 = vpop.xlane.xlu0 %2063
        %vm2065 = vcmp.eq.f32.partialorder %v2062, %v2064
        %v2066 = vsel %vm2065, %v2061, inf
        %2067 = vmin.xlane.f32.xlu0 %v2066
        %v2068 = vpop.xlane.xlu0 %2067
        %v2069 = vcvt.f32.s32 %v2068
        %v2070 = vcvt.f32.s32 %v2064
        %v2071 = vshll.u32 %v2070, 16
        %v2072 = vadd.s32 %v2071, %v2069
        %v2073 = vsel %vm458, %v2037, 2147483647
        %v2074 = vand.u32 %v2073, 65535
        %v2075 = vshra.s32 %v2073, 16
        %v2076 = vcvt.s32.f32 %v2074
        %v2077 = vcvt.s32.f32 %v2075
        %2078 = vmin.xlane.f32.xlu0 %v2077
        %v2079 = vpop.xlane.xlu0 %2078
        %vm2080 = vcmp.eq.f32.partialorder %v2077, %v2079
        %v2081 = vsel %vm2080, %v2076, inf
        %2082 = vmin.xlane.f32.xlu0 %v2081
        %v2083 = vpop.xlane.xlu0 %2082
        %v2084 = vcvt.f32.s32 %v2083
        %v2085 = vcvt.f32.s32 %v2079
        %v2086 = vshll.u32 %v2085, 16
        %v2087 = vadd.s32 %v2086, %v2084
        %v2088 = vsel %vm458, %v2038, 2147483647
        %v2089 = vand.u32 %v2088, 65535
        %v2090 = vshra.s32 %v2088, 16
        %v2091 = vcvt.s32.f32 %v2089
        %v2092 = vcvt.s32.f32 %v2090
        %2093 = vmin.xlane.f32.xlu0 %v2092
        %v2094 = vpop.xlane.xlu0 %2093
        %vm2095 = vcmp.eq.f32.partialorder %v2092, %v2094
        %v2096 = vsel %vm2095, %v2091, inf
        %2097 = vmin.xlane.f32.xlu0 %v2096
        %v2098 = vpop.xlane.xlu0 %2097
        %v2099 = vcvt.f32.s32 %v2098
        %v2100 = vcvt.f32.s32 %v2094
        %v2101 = vshll.u32 %v2100, 16
        %v2102 = vadd.s32 %v2101, %v2099
        %v2103 = vsel %vm458, %v2039, 2147483647
        %v2104 = vand.u32 %v2103, 65535
        %v2105 = vshra.s32 %v2103, 16
        %v2106 = vcvt.s32.f32 %v2104
        %v2107 = vcvt.s32.f32 %v2105
        %2108 = vmin.xlane.f32.xlu0 %v2107
        %v2109 = vpop.xlane.xlu0 %2108
        %vm2110 = vcmp.eq.f32.partialorder %v2107, %v2109
        %v2111 = vsel %vm2110, %v2106, inf
        %2112 = vmin.xlane.f32.xlu0 %v2111
        %v2113 = vpop.xlane.xlu0 %2112
        %v2114 = vcvt.f32.s32 %v2113
        %v2115 = vcvt.f32.s32 %v2109
        %v2116 = vshll.u32 %v2115, 16
        %v2117 = vadd.s32 %v2116, %v2114
        %v2118 = vsel %vm458, %v2040, 2147483647
        %v2119 = vand.u32 %v2118, 65535
        %v2120 = vshra.s32 %v2118, 16
        %v2121 = vcvt.s32.f32 %v2119
        %v2122 = vcvt.s32.f32 %v2120
        %2123 = vmin.xlane.f32.xlu0 %v2122
        %v2124 = vpop.xlane.xlu0 %2123
        %vm2125 = vcmp.eq.f32.partialorder %v2122, %v2124
        %v2126 = vsel %vm2125, %v2121, inf
        %2127 = vmin.xlane.f32.xlu0 %v2126
        %v2128 = vpop.xlane.xlu0 %2127
        %v2129 = vcvt.f32.s32 %v2128
        %v2130 = vcvt.f32.s32 %v2124
        %v2131 = vshll.u32 %v2130, 16
        %v2132 = vadd.s32 %v2131, %v2129
        %v2133 = vsel %vm458, %v2041, 2147483647
        %v2134 = vand.u32 %v2133, 65535
        %v2135 = vshra.s32 %v2133, 16
        %v2136 = vcvt.s32.f32 %v2134
        %v2137 = vcvt.s32.f32 %v2135
        %2138 = vmin.xlane.f32.xlu0 %v2137
        %v2139 = vpop.xlane.xlu0 %2138
        %vm2140 = vcmp.eq.f32.partialorder %v2137, %v2139
        %v2141 = vsel %vm2140, %v2136, inf
        %2142 = vmin.xlane.f32.xlu0 %v2141
        %v2143 = vpop.xlane.xlu0 %2142
        %v2144 = vcvt.f32.s32 %v2143
        %v2145 = vcvt.f32.s32 %v2139
        %v2146 = vshll.u32 %v2145, 16
        %v2147 = vadd.s32 %v2146, %v2144
        %v2148 = vsel %vm458, %v2042, 2147483647
        %v2149 = vand.u32 %v2148, 65535
        %v2150 = vshra.s32 %v2148, 16
        %v2151 = vcvt.s32.f32 %v2149
        %v2152 = vcvt.s32.f32 %v2150
        %2153 = vmin.xlane.f32.xlu0 %v2152
        %v2154 = vpop.xlane.xlu0 %2153
        %vm2155 = vcmp.eq.f32.partialorder %v2152, %v2154
        %v2156 = vsel %vm2155, %v2151, inf
        %2157 = vmin.xlane.f32.xlu0 %v2156
        %v2158 = vpop.xlane.xlu0 %2157
        %v2159 = vcvt.f32.s32 %v2158
        %v2160 = vcvt.f32.s32 %v2154
        %v2161 = vshll.u32 %v2160, 16
        %v2162 = vadd.s32 %v2161, %v2159
        %vm2163 = vcmp.eq.s32.totalorder %v457, %v2057
        %vm2164 = vcmp.eq.s32.totalorder %v457, %v2072
        %vm2165 = vcmp.eq.s32.totalorder %v457, %v2087
        %vm2166 = vcmp.eq.s32.totalorder %v457, %v2102
        %vm2167 = vcmp.eq.s32.totalorder %v457, %v2117
        %vm2168 = vcmp.eq.s32.totalorder %v457, %v2132
        %vm2169 = vcmp.eq.s32.totalorder %v457, %v2147
        %vm2170 = vcmp.eq.s32.totalorder %v457, %v2162
        %v2171 = vsel %vm2163, -inf, %v1987
        %v2172 = vsel %vm2164, -inf, %v1988
        %v2173 = vsel %vm2165, -inf, %v1989
        %v2174 = vsel %vm2166, -inf, %v1990
        %v2175 = vsel %vm2167, -inf, %v1991
        %v2176 = vsel %vm2168, -inf, %v1992
        %v2177 = vsel %vm2169, -inf, %v1993
        %v2178 = vsel %vm2170, -inf, %v1994
        %v2179 = vsel %vm458, %v2171, -inf
        %2180 = vmax.xlane.f32.xlu0 %v2179
        %v2181 = vpop.xlane.xlu0 %2180
        %v2182 = vsel %vm458, %v2172, -inf
        %2183 = vmax.xlane.f32.xlu0 %v2182
        %v2184 = vpop.xlane.xlu0 %2183
        %v2185 = vsel %vm458, %v2173, -inf
        %2186 = vmax.xlane.f32.xlu0 %v2185
        %v2187 = vpop.xlane.xlu0 %2186
        %v2188 = vsel %vm458, %v2174, -inf
        %2189 = vmax.xlane.f32.xlu0 %v2188
        %v2190 = vpop.xlane.xlu0 %2189
        %v2191 = vsel %vm458, %v2175, -inf
        %2192 = vmax.xlane.f32.xlu0 %v2191
        %v2193 = vpop.xlane.xlu0 %2192
        %v2194 = vsel %vm458, %v2176, -inf
        %2195 = vmax.xlane.f32.xlu0 %v2194
        %v2196 = vpop.xlane.xlu0 %2195
        %v2197 = vsel %vm458, %v2177, -inf
        %2198 = vmax.xlane.f32.xlu0 %v2197
        %v2199 = vpop.xlane.xlu0 %2198
        %v2200 = vsel %vm458, %v2178, -inf
        %2201 = vmax.xlane.f32.xlu0 %v2200
        %v2202 = vpop.xlane.xlu0 %2201
        %v2203 = vadd.f32 %v2019, %v2181
        %v2204 = vadd.f32 %v2020, %v2184
        %v2205 = vadd.f32 %v2021, %v2187
        %v2206 = vadd.f32 %v2022, %v2190
        %v2207 = vadd.f32 %v2023, %v2193
        %v2208 = vadd.f32 %v2024, %v2196
        %v2209 = vadd.f32 %v2025, %v2199
        %v2210 = vadd.f32 %v2026, %v2202
        %v2211 = vsel %vm859, %v2203, 0.0
        %v2212 = vsel %vm859, %v2204, 0.0
        %v2213 = vadd.f32 %v2211, %v2212
        %v2214 = vsel %vm859, %v2205, 0.0
        %v2215 = vadd.f32 %v2213, %v2214
        %v2216 = vsel %vm859, %v2206, 0.0
        %v2217 = vadd.f32 %v2215, %v2216
        %v2218 = vsel %vm859, %v2207, 0.0
        %v2219 = vadd.f32 %v2217, %v2218
        %v2220 = vsel %vm859, %v2208, 0.0
        %v2221 = vadd.f32 %v2219, %v2220
        %v2222 = vsel %vm859, %v2209, 0.0
        %v2223 = vadd.f32 %v2221, %v2222
        %v2224 = vsel %vm859, %v2210, 0.0
        %v2225 = vadd.f32 %v2223, %v2224
        %2226 = vadd.xlane.f32.xlu0 %v2225
        %v2227 = vpop.xlane.xlu0 %2226
        %v2228 = vrot.slane %v2227, 4
        %v2229 = vadd.f32 %v2227, %v2228
        %v2230 = vrot.slane %v2229, 2
        %v2231 = vadd.f32 %v2229, %v2230
        %v2232 = vrot.slane %v2231, 1
        %v2233 = vadd.f32 %v2231, %v2232
        %s2234 = vtos %v2233
        %vm2235 = vcmp.eq.s32.totalorder %v457, 3
        %v2236 = vstv %s2234
        %v2237 = vsel %vm2235, %v2236, 0.0
        %v2238 = vadd.f32 %v1778, %v2237
        %v2239 = vsel %vm458, %v426, -inf
        %2240 = vmax.xlane.f32.xlu0 %v2239
        %v2241 = vpop.xlane.xlu0 %2240
        %v2242 = vsel %vm458, %v429, -inf
        %2243 = vmax.xlane.f32.xlu0 %v2242
        %v2244 = vpop.xlane.xlu0 %2243
        %v2245 = vsel %vm458, %v434, -inf
        %2246 = vmax.xlane.f32.xlu0 %v2245
        %v2247 = vpop.xlane.xlu0 %2246
        %v2248 = vsel %vm458, %v437, -inf
        %2249 = vmax.xlane.f32.xlu0 %v2248
        %v2250 = vpop.xlane.xlu0 %2249
        %v2251 = vsel %vm458, %v442, -inf
        %2252 = vmax.xlane.f32.xlu0 %v2251
        %v2253 = vpop.xlane.xlu0 %2252
        %v2254 = vsel %vm458, %v445, -inf
        %2255 = vmax.xlane.f32.xlu0 %v2254
        %v2256 = vpop.xlane.xlu0 %2255
        %v2257 = vsel %vm458, %v450, -inf
        %2258 = vmax.xlane.f32.xlu0 %v2257
        %v2259 = vpop.xlane.xlu0 %2258
        %v2260 = vsel %vm458, %v453, -inf
        %2261 = vmax.xlane.f32.xlu0 %v2260
        %v2262 = vpop.xlane.xlu0 %2261
        %v2263 = vadd.f32 %v2241, 0.0
        %v2264 = vadd.f32 %v2244, 0.0
        %v2265 = vadd.f32 %v2247, 0.0
        %v2266 = vadd.f32 %v2250, 0.0
        %v2267 = vadd.f32 %v2253, 0.0
        %v2268 = vadd.f32 %v2256, 0.0
        %v2269 = vadd.f32 %v2259, 0.0
        %v2270 = vadd.f32 %v2262, 0.0
        %vm2271 = vcmp.eq.f32.partialorder %v426, %v2241
        %vm2272 = vcmp.eq.f32.partialorder %v429, %v2244
        %vm2273 = vcmp.eq.f32.partialorder %v434, %v2247
        %vm2274 = vcmp.eq.f32.partialorder %v437, %v2250
        %vm2275 = vcmp.eq.f32.partialorder %v442, %v2253
        %vm2276 = vcmp.eq.f32.partialorder %v445, %v2256
        %vm2277 = vcmp.eq.f32.partialorder %v450, %v2259
        %vm2278 = vcmp.eq.f32.partialorder %v453, %v2262
        %v2279 = vsel %vm2271, %v457, 64
        %v2280 = vsel %vm2272, %v457, 64
        %v2281 = vsel %vm2273, %v457, 64
        %v2282 = vsel %vm2274, %v457, 64
        %v2283 = vsel %vm2275, %v457, 64
        %v2284 = vsel %vm2276, %v457, 64
        %v2285 = vsel %vm2277, %v457, 64
        %v2286 = vsel %vm2278, %v457, 64
        %v2287 = vsel %vm458, %v2279, 2147483647
        %v2288 = vand.u32 %v2287, 65535
        %v2289 = vshra.s32 %v2287, 16
        %v2290 = vcvt.s32.f32 %v2288
        %v2291 = vcvt.s32.f32 %v2289
        %2292 = vmin.xlane.f32.xlu0 %v2291
        %v2293 = vpop.xlane.xlu0 %2292
        %vm2294 = vcmp.eq.f32.partialorder %v2291, %v2293
        %v2295 = vsel %vm2294, %v2290, inf
        %2296 = vmin.xlane.f32.xlu0 %v2295
        %v2297 = vpop.xlane.xlu0 %2296
        %v2298 = vcvt.f32.s32 %v2297
        %v2299 = vcvt.f32.s32 %v2293
        %v2300 = vshll.u32 %v2299, 16
        %v2301 = vadd.s32 %v2300, %v2298
        %v2302 = vsel %vm458, %v2280, 2147483647
        %v2303 = vand.u32 %v2302, 65535
        %v2304 = vshra.s32 %v2302, 16
        %v2305 = vcvt.s32.f32 %v2303
        %v2306 = vcvt.s32.f32 %v2304
        %2307 = vmin.xlane.f32.xlu0 %v2306
        %v2308 = vpop.xlane.xlu0 %2307
        %vm2309 = vcmp.eq.f32.partialorder %v2306, %v2308
        %v2310 = vsel %vm2309, %v2305, inf
        %2311 = vmin.xlane.f32.xlu0 %v2310
        %v2312 = vpop.xlane.xlu0 %2311
        %v2313 = vcvt.f32.s32 %v2312
        %v2314 = vcvt.f32.s32 %v2308
        %v2315 = vshll.u32 %v2314, 16
        %v2316 = vadd.s32 %v2315, %v2313
        %v2317 = vsel %vm458, %v2281, 2147483647
        %v2318 = vand.u32 %v2317, 65535
        %v2319 = vshra.s32 %v2317, 16
        %v2320 = vcvt.s32.f32 %v2318
        %v2321 = vcvt.s32.f32 %v2319
        %2322 = vmin.xlane.f32.xlu0 %v2321
        %v2323 = vpop.xlane.xlu0 %2322
        %vm2324 = vcmp.eq.f32.partialorder %v2321, %v2323
        %v2325 = vsel %vm2324, %v2320, inf
        %2326 = vmin.xlane.f32.xlu0 %v2325
        %v2327 = vpop.xlane.xlu0 %2326
        %v2328 = vcvt.f32.s32 %v2327
        %v2329 = vcvt.f32.s32 %v2323
        %v2330 = vshll.u32 %v2329, 16
        %v2331 = vadd.s32 %v2330, %v2328
        %v2332 = vsel %vm458, %v2282, 2147483647
        %v2333 = vand.u32 %v2332, 65535
        %v2334 = vshra.s32 %v2332, 16
        %v2335 = vcvt.s32.f32 %v2333
        %v2336 = vcvt.s32.f32 %v2334
        %2337 = vmin.xlane.f32.xlu0 %v2336
        %v2338 = vpop.xlane.xlu0 %2337
        %vm2339 = vcmp.eq.f32.partialorder %v2336, %v2338
        %v2340 = vsel %vm2339, %v2335, inf
        %2341 = vmin.xlane.f32.xlu0 %v2340
        %v2342 = vpop.xlane.xlu0 %2341
        %v2343 = vcvt.f32.s32 %v2342
        %v2344 = vcvt.f32.s32 %v2338
        %v2345 = vshll.u32 %v2344, 16
        %v2346 = vadd.s32 %v2345, %v2343
        %v2347 = vsel %vm458, %v2283, 2147483647
        %v2348 = vand.u32 %v2347, 65535
        %v2349 = vshra.s32 %v2347, 16
        %v2350 = vcvt.s32.f32 %v2348
        %v2351 = vcvt.s32.f32 %v2349
        %2352 = vmin.xlane.f32.xlu0 %v2351
        %v2353 = vpop.xlane.xlu0 %2352
        %vm2354 = vcmp.eq.f32.partialorder %v2351, %v2353
        %v2355 = vsel %vm2354, %v2350, inf
        %2356 = vmin.xlane.f32.xlu0 %v2355
        %v2357 = vpop.xlane.xlu0 %2356
        %v2358 = vcvt.f32.s32 %v2357
        %v2359 = vcvt.f32.s32 %v2353
        %v2360 = vshll.u32 %v2359, 16
        %v2361 = vadd.s32 %v2360, %v2358
        %v2362 = vsel %vm458, %v2284, 2147483647
        %v2363 = vand.u32 %v2362, 65535
        %v2364 = vshra.s32 %v2362, 16
        %v2365 = vcvt.s32.f32 %v2363
        %v2366 = vcvt.s32.f32 %v2364
        %2367 = vmin.xlane.f32.xlu0 %v2366
        %v2368 = vpop.xlane.xlu0 %2367
        %vm2369 = vcmp.eq.f32.partialorder %v2366, %v2368
        %v2370 = vsel %vm2369, %v2365, inf
        %2371 = vmin.xlane.f32.xlu0 %v2370
        %v2372 = vpop.xlane.xlu0 %2371
        %v2373 = vcvt.f32.s32 %v2372
        %v2374 = vcvt.f32.s32 %v2368
        %v2375 = vshll.u32 %v2374, 16
        %v2376 = vadd.s32 %v2375, %v2373
        %v2377 = vsel %vm458, %v2285, 2147483647
        %v2378 = vand.u32 %v2377, 65535
        %v2379 = vshra.s32 %v2377, 16
        %v2380 = vcvt.s32.f32 %v2378
        %v2381 = vcvt.s32.f32 %v2379
        %2382 = vmin.xlane.f32.xlu0 %v2381
        %v2383 = vpop.xlane.xlu0 %2382
        %vm2384 = vcmp.eq.f32.partialorder %v2381, %v2383
        %v2385 = vsel %vm2384, %v2380, inf
        %2386 = vmin.xlane.f32.xlu0 %v2385
        %v2387 = vpop.xlane.xlu0 %2386
        %v2388 = vcvt.f32.s32 %v2387
        %v2389 = vcvt.f32.s32 %v2383
        %v2390 = vshll.u32 %v2389, 16
        %v2391 = vadd.s32 %v2390, %v2388
        %v2392 = vsel %vm458, %v2286, 2147483647
        %v2393 = vand.u32 %v2392, 65535
        %v2394 = vshra.s32 %v2392, 16
        %v2395 = vcvt.s32.f32 %v2393
        %v2396 = vcvt.s32.f32 %v2394
        %2397 = vmin.xlane.f32.xlu0 %v2396
        %v2398 = vpop.xlane.xlu0 %2397
        %vm2399 = vcmp.eq.f32.partialorder %v2396, %v2398
        %v2400 = vsel %vm2399, %v2395, inf
        %2401 = vmin.xlane.f32.xlu0 %v2400
        %v2402 = vpop.xlane.xlu0 %2401
        %v2403 = vcvt.f32.s32 %v2402
        %v2404 = vcvt.f32.s32 %v2398
        %v2405 = vshll.u32 %v2404, 16
        %v2406 = vadd.s32 %v2405, %v2403
        %vm2407 = vcmp.eq.s32.totalorder %v457, %v2301
        %vm2408 = vcmp.eq.s32.totalorder %v457, %v2316
        %vm2409 = vcmp.eq.s32.totalorder %v457, %v2331
        %vm2410 = vcmp.eq.s32.totalorder %v457, %v2346
        %vm2411 = vcmp.eq.s32.totalorder %v457, %v2361
        %vm2412 = vcmp.eq.s32.totalorder %v457, %v2376
        %vm2413 = vcmp.eq.s32.totalorder %v457, %v2391
        %vm2414 = vcmp.eq.s32.totalorder %v457, %v2406
        %v2415 = vsel %vm2407, -inf, %v426
        %v2416 = vsel %vm2408, -inf, %v429
        %v2417 = vsel %vm2409, -inf, %v434
        %v2418 = vsel %vm2410, -inf, %v437
        %v2419 = vsel %vm2411, -inf, %v442
        %v2420 = vsel %vm2412, -inf, %v445
        %v2421 = vsel %vm2413, -inf, %v450
        %v2422 = vsel %vm2414, -inf, %v453
        %v2423 = vsel %vm458, %v2415, -inf
        %2424 = vmax.xlane.f32.xlu0 %v2423
        %v2425 = vpop.xlane.xlu0 %2424
        %v2426 = vsel %vm458, %v2416, -inf
        %2427 = vmax.xlane.f32.xlu0 %v2426
        %v2428 = vpop.xlane.xlu0 %2427
        %v2429 = vsel %vm458, %v2417, -inf
        %2430 = vmax.xlane.f32.xlu0 %v2429
        %v2431 = vpop.xlane.xlu0 %2430
        %v2432 = vsel %vm458, %v2418, -inf
        %2433 = vmax.xlane.f32.xlu0 %v2432
        %v2434 = vpop.xlane.xlu0 %2433
        %v2435 = vsel %vm458, %v2419, -inf
        %2436 = vmax.xlane.f32.xlu0 %v2435
        %v2437 = vpop.xlane.xlu0 %2436
        %v2438 = vsel %vm458, %v2420, -inf
        %2439 = vmax.xlane.f32.xlu0 %v2438
        %v2440 = vpop.xlane.xlu0 %2439
        %v2441 = vsel %vm458, %v2421, -inf
        %2442 = vmax.xlane.f32.xlu0 %v2441
        %v2443 = vpop.xlane.xlu0 %2442
        %v2444 = vsel %vm458, %v2422, -inf
        %2445 = vmax.xlane.f32.xlu0 %v2444
        %v2446 = vpop.xlane.xlu0 %2445
        %v2447 = vadd.f32 %v2263, %v2425
        %v2448 = vadd.f32 %v2264, %v2428
        %v2449 = vadd.f32 %v2265, %v2431
        %v2450 = vadd.f32 %v2266, %v2434
        %v2451 = vadd.f32 %v2267, %v2437
        %v2452 = vadd.f32 %v2268, %v2440
        %v2453 = vadd.f32 %v2269, %v2443
        %v2454 = vadd.f32 %v2270, %v2446
        %vm2455 = vcmp.eq.f32.partialorder %v2415, %v2425
        %vm2456 = vcmp.eq.f32.partialorder %v2416, %v2428
        %vm2457 = vcmp.eq.f32.partialorder %v2417, %v2431
        %vm2458 = vcmp.eq.f32.partialorder %v2418, %v2434
        %vm2459 = vcmp.eq.f32.partialorder %v2419, %v2437
        %vm2460 = vcmp.eq.f32.partialorder %v2420, %v2440
        %vm2461 = vcmp.eq.f32.partialorder %v2421, %v2443
        %vm2462 = vcmp.eq.f32.partialorder %v2422, %v2446
        %v2463 = vsel %vm2455, %v457, 64
        %v2464 = vsel %vm2456, %v457, 64
        %v2465 = vsel %vm2457, %v457, 64
        %v2466 = vsel %vm2458, %v457, 64
        %v2467 = vsel %vm2459, %v457, 64
        %v2468 = vsel %vm2460, %v457, 64
        %v2469 = vsel %vm2461, %v457, 64
        %v2470 = vsel %vm2462, %v457, 64
        %v2471 = vsel %vm458, %v2463, 2147483647
        %v2472 = vand.u32 %v2471, 65535
        %v2473 = vshra.s32 %v2471, 16
        %v2474 = vcvt.s32.f32 %v2472
        %v2475 = vcvt.s32.f32 %v2473
        %2476 = vmin.xlane.f32.xlu0 %v2475
        %v2477 = vpop.xlane.xlu0 %2476
        %vm2478 = vcmp.eq.f32.partialorder %v2475, %v2477
        %v2479 = vsel %vm2478, %v2474, inf
        %2480 = vmin.xlane.f32.xlu0 %v2479
        %v2481 = vpop.xlane.xlu0 %2480
        %v2482 = vcvt.f32.s32 %v2481
        %v2483 = vcvt.f32.s32 %v2477
        %v2484 = vshll.u32 %v2483, 16
        %v2485 = vadd.s32 %v2484, %v2482
        %v2486 = vsel %vm458, %v2464, 2147483647
        %v2487 = vand.u32 %v2486, 65535
        %v2488 = vshra.s32 %v2486, 16
        %v2489 = vcvt.s32.f32 %v2487
        %v2490 = vcvt.s32.f32 %v2488
        %2491 = vmin.xlane.f32.xlu0 %v2490
        %v2492 = vpop.xlane.xlu0 %2491
        %vm2493 = vcmp.eq.f32.partialorder %v2490, %v2492
        %v2494 = vsel %vm2493, %v2489, inf
        %2495 = vmin.xlane.f32.xlu0 %v2494
        %v2496 = vpop.xlane.xlu0 %2495
        %v2497 = vcvt.f32.s32 %v2496
        %v2498 = vcvt.f32.s32 %v2492
        %v2499 = vshll.u32 %v2498, 16
        %v2500 = vadd.s32 %v2499, %v2497
        %v2501 = vsel %vm458, %v2465, 2147483647
        %v2502 = vand.u32 %v2501, 65535
        %v2503 = vshra.s32 %v2501, 16
        %v2504 = vcvt.s32.f32 %v2502
        %v2505 = vcvt.s32.f32 %v2503
        %2506 = vmin.xlane.f32.xlu0 %v2505
        %v2507 = vpop.xlane.xlu0 %2506
        %vm2508 = vcmp.eq.f32.partialorder %v2505, %v2507
        %v2509 = vsel %vm2508, %v2504, inf
        %2510 = vmin.xlane.f32.xlu0 %v2509
        %v2511 = vpop.xlane.xlu0 %2510
        %v2512 = vcvt.f32.s32 %v2511
        %v2513 = vcvt.f32.s32 %v2507
        %v2514 = vshll.u32 %v2513, 16
        %v2515 = vadd.s32 %v2514, %v2512
        %v2516 = vsel %vm458, %v2466, 2147483647
        %v2517 = vand.u32 %v2516, 65535
        %v2518 = vshra.s32 %v2516, 16
        %v2519 = vcvt.s32.f32 %v2517
        %v2520 = vcvt.s32.f32 %v2518
        %2521 = vmin.xlane.f32.xlu0 %v2520
        %v2522 = vpop.xlane.xlu0 %2521
        %vm2523 = vcmp.eq.f32.partialorder %v2520, %v2522
        %v2524 = vsel %vm2523, %v2519, inf
        %2525 = vmin.xlane.f32.xlu0 %v2524
        %v2526 = vpop.xlane.xlu0 %2525
        %v2527 = vcvt.f32.s32 %v2526
        %v2528 = vcvt.f32.s32 %v2522
        %v2529 = vshll.u32 %v2528, 16
        %v2530 = vadd.s32 %v2529, %v2527
        %v2531 = vsel %vm458, %v2467, 2147483647
        %v2532 = vand.u32 %v2531, 65535
        %v2533 = vshra.s32 %v2531, 16
        %v2534 = vcvt.s32.f32 %v2532
        %v2535 = vcvt.s32.f32 %v2533
        %2536 = vmin.xlane.f32.xlu0 %v2535
        %v2537 = vpop.xlane.xlu0 %2536
        %vm2538 = vcmp.eq.f32.partialorder %v2535, %v2537
        %v2539 = vsel %vm2538, %v2534, inf
        %2540 = vmin.xlane.f32.xlu0 %v2539
        %v2541 = vpop.xlane.xlu0 %2540
        %v2542 = vcvt.f32.s32 %v2541
        %v2543 = vcvt.f32.s32 %v2537
        %v2544 = vshll.u32 %v2543, 16
        %v2545 = vadd.s32 %v2544, %v2542
        %v2546 = vsel %vm458, %v2468, 2147483647
        %v2547 = vand.u32 %v2546, 65535
        %v2548 = vshra.s32 %v2546, 16
        %v2549 = vcvt.s32.f32 %v2547
        %v2550 = vcvt.s32.f32 %v2548
        %2551 = vmin.xlane.f32.xlu0 %v2550
        %v2552 = vpop.xlane.xlu0 %2551
        %vm2553 = vcmp.eq.f32.partialorder %v2550, %v2552
        %v2554 = vsel %vm2553, %v2549, inf
        %2555 = vmin.xlane.f32.xlu0 %v2554
        %v2556 = vpop.xlane.xlu0 %2555
        %v2557 = vcvt.f32.s32 %v2556
        %v2558 = vcvt.f32.s32 %v2552
        %v2559 = vshll.u32 %v2558, 16
        %v2560 = vadd.s32 %v2559, %v2557
        %v2561 = vsel %vm458, %v2469, 2147483647
        %v2562 = vand.u32 %v2561, 65535
        %v2563 = vshra.s32 %v2561, 16
        %v2564 = vcvt.s32.f32 %v2562
        %v2565 = vcvt.s32.f32 %v2563
        %2566 = vmin.xlane.f32.xlu0 %v2565
        %v2567 = vpop.xlane.xlu0 %2566
        %vm2568 = vcmp.eq.f32.partialorder %v2565, %v2567
        %v2569 = vsel %vm2568, %v2564, inf
        %2570 = vmin.xlane.f32.xlu0 %v2569
        %v2571 = vpop.xlane.xlu0 %2570
        %v2572 = vcvt.f32.s32 %v2571
        %v2573 = vcvt.f32.s32 %v2567
        %v2574 = vshll.u32 %v2573, 16
        %v2575 = vadd.s32 %v2574, %v2572
        %v2576 = vsel %vm458, %v2470, 2147483647
        %v2577 = vand.u32 %v2576, 65535
        %v2578 = vshra.s32 %v2576, 16
        %v2579 = vcvt.s32.f32 %v2577
        %v2580 = vcvt.s32.f32 %v2578
        %2581 = vmin.xlane.f32.xlu0 %v2580
        %v2582 = vpop.xlane.xlu0 %2581
        %vm2583 = vcmp.eq.f32.partialorder %v2580, %v2582
        %v2584 = vsel %vm2583, %v2579, inf
        %2585 = vmin.xlane.f32.xlu0 %v2584
        %v2586 = vpop.xlane.xlu0 %2585
        %v2587 = vcvt.f32.s32 %v2586
        %v2588 = vcvt.f32.s32 %v2582
        %v2589 = vshll.u32 %v2588, 16
        %v2590 = vadd.s32 %v2589, %v2587
        %vm2591 = vcmp.eq.s32.totalorder %v457, %v2485
        %vm2592 = vcmp.eq.s32.totalorder %v457, %v2500
        %vm2593 = vcmp.eq.s32.totalorder %v457, %v2515
        %vm2594 = vcmp.eq.s32.totalorder %v457, %v2530
        %vm2595 = vcmp.eq.s32.totalorder %v457, %v2545
        %vm2596 = vcmp.eq.s32.totalorder %v457, %v2560
        %vm2597 = vcmp.eq.s32.totalorder %v457, %v2575
        %vm2598 = vcmp.eq.s32.totalorder %v457, %v2590
        %v2599 = vsel %vm2591, -inf, %v2415
        %v2600 = vsel %vm2592, -inf, %v2416
        %v2601 = vsel %vm2593, -inf, %v2417
        %v2602 = vsel %vm2594, -inf, %v2418
        %v2603 = vsel %vm2595, -inf, %v2419
        %v2604 = vsel %vm2596, -inf, %v2420
        %v2605 = vsel %vm2597, -inf, %v2421
        %v2606 = vsel %vm2598, -inf, %v2422
        %v2607 = vsel %vm458, %v2599, -inf
        %2608 = vmax.xlane.f32.xlu0 %v2607
        %v2609 = vpop.xlane.xlu0 %2608
        %v2610 = vsel %vm458, %v2600, -inf
        %2611 = vmax.xlane.f32.xlu0 %v2610
        %v2612 = vpop.xlane.xlu0 %2611
        %v2613 = vsel %vm458, %v2601, -inf
        %2614 = vmax.xlane.f32.xlu0 %v2613
        %v2615 = vpop.xlane.xlu0 %2614
        %v2616 = vsel %vm458, %v2602, -inf
        %2617 = vmax.xlane.f32.xlu0 %v2616
        %v2618 = vpop.xlane.xlu0 %2617
        %v2619 = vsel %vm458, %v2603, -inf
        %2620 = vmax.xlane.f32.xlu0 %v2619
        %v2621 = vpop.xlane.xlu0 %2620
        %v2622 = vsel %vm458, %v2604, -inf
        %2623 = vmax.xlane.f32.xlu0 %v2622
        %v2624 = vpop.xlane.xlu0 %2623
        %v2625 = vsel %vm458, %v2605, -inf
        %2626 = vmax.xlane.f32.xlu0 %v2625
        %v2627 = vpop.xlane.xlu0 %2626
        %v2628 = vsel %vm458, %v2606, -inf
        %2629 = vmax.xlane.f32.xlu0 %v2628
        %v2630 = vpop.xlane.xlu0 %2629
        %v2631 = vadd.f32 %v2447, %v2609
        %v2632 = vadd.f32 %v2448, %v2612
        %v2633 = vadd.f32 %v2449, %v2615
        %v2634 = vadd.f32 %v2450, %v2618
        %v2635 = vadd.f32 %v2451, %v2621
        %v2636 = vadd.f32 %v2452, %v2624
        %v2637 = vadd.f32 %v2453, %v2627
        %v2638 = vadd.f32 %v2454, %v2630
        %v2639 = vsel %vm859, %v2631, 0.0
        %v2640 = vsel %vm859, %v2632, 0.0
        %v2641 = vadd.f32 %v2639, %v2640
        %v2642 = vsel %vm859, %v2633, 0.0
        %v2643 = vadd.f32 %v2641, %v2642
        %v2644 = vsel %vm859, %v2634, 0.0
        %v2645 = vadd.f32 %v2643, %v2644
        %v2646 = vsel %vm859, %v2635, 0.0
        %v2647 = vadd.f32 %v2645, %v2646
        %v2648 = vsel %vm859, %v2636, 0.0
        %v2649 = vadd.f32 %v2647, %v2648
        %v2650 = vsel %vm859, %v2637, 0.0
        %v2651 = vadd.f32 %v2649, %v2650
        %v2652 = vsel %vm859, %v2638, 0.0
        %v2653 = vadd.f32 %v2651, %v2652
        %2654 = vadd.xlane.f32.xlu0 %v2653
        %v2655 = vpop.xlane.xlu0 %2654
        %v2656 = vrot.slane %v2655, 4
        %v2657 = vadd.f32 %v2655, %v2656
        %v2658 = vrot.slane %v2657, 2
        %v2659 = vadd.f32 %v2657, %v2658
        %v2660 = vrot.slane %v2659, 1
        %v2661 = vadd.f32 %v2659, %v2660
        %s2662 = vtos %v2661
        %vm2663 = vcmp.eq.s32.totalorder %v457, 4
        %v2664 = vstv %s2662
        %v2665 = vsel %vm2663, %v2664, 0.0
        %v2666 = vadd.f32 %v2238, %v2665
        %2667 = vst [vmem:[%s175] sm:$0x1] %v2666
        %s2668 = sand.u32 %s75, 1
        %s2669 = scalar_lea.sflag [#allocation4], %s2668
        %s2670 = sand.u32 %s75, 1
        %s2671 = scalar_lea.vmem [#allocation7], %s2670
        // Predicated region
        $region37: #{tpu_custom_call.1} parent=27 // pred_check
          %p2672 = pneg %p85
        $region38: #{tpu_custom_call.1} parent=27 // pred_check_branch
          %2674 = sbr.rel (%p2672) target = $region40
        $region39: #{tpu_custom_call.1} parent=27 // pred_region
          %s2676 = ssub.s32 16, 16
          %2677 = vsyncadd %s2669, %s2676
          %s2678 = smul.addr %s20, 16
          %s2679 = scalar_lea.hbm %s2, %s2678
          %s2681 = sshll.u32 %s2671, 4
          %s2682 = int_to_ptr.vmem [resolvable:$true] %s2681
          %2684 = dma.vmem_to_hbm [thread:$0]  %s2682, 16, %s2679, %s2669
        $region40: #{tpu_custom_call.1} parent=27 // pred_fallthru
          _
      $region28: #{tpu_custom_call.1} parent=5 // pred_fallthru
        _
      %p2685 = scmp.le.s32.totalorder 2, %s15
      // Predicated region
      $region41: #{tpu_custom_call.1} parent=5 // pred_check
        %p2686 = pneg %p2685
      $region42: #{tpu_custom_call.1} parent=5 // pred_check_branch
        %2688 = sbr.rel (%p2686) target = $region44
      $region43: #{tpu_custom_call.1} parent=5 // pred_region
        %s2689 = ssub.s32 %s15, 2
        // Predicated region
        $region45: #{tpu_custom_call.1} parent=43 // pred_check
          %p2690 = pneg %p91
        $region46: #{tpu_custom_call.1} parent=43 // pred_check_branch
          %2692 = sbr.rel (%p2690) target = $region48
        $region47: #{tpu_custom_call.1} parent=43 // pred_region
          %s2693 = sand.u32 %s76, 1
          %s2694 = scalar_lea.sflag [#allocation4], %s2693
          %s2695 = sand.u32 %s76, 1
          %s2696 = scalar_lea.vmem [#allocation7], %s2695
          %2697 = dma.done %s2694, 16
        $region48: #{tpu_custom_call.1} parent=43 // pred_fallthru
          _
      $region44: #{tpu_custom_call.1} parent=5 // pred_fallthru
        _
    $region6: #{tpu_custom_call.1} parent=1 // loop_footer
      %s19 = sadd.s32 1, %s15
    $region7: #{tpu_custom_call.1} parent=1 // loop_footer_branch
      %14 = sbr.rel target = $region3
    $region8: #{tpu_custom_call.1} parent=1 // loop_exit
      _
    %2698 = vsyncpa [#allocation3], 1
    %s2699 = scalar_lea.sflag [#allocation3], 1
    %2700 = vsyncpa %s2699, 1
    %2701 = vsyncpa [#allocation6], 1
    %2702 = vsyncpa [#allocation4], 1
    %s2703 = scalar_lea.sflag [#allocation4], 1
    %2704 = vsyncpa %s2703, 1

</llo_original>
